<compile_context>
chip_gen: v7x
topology: tpu7x:2x2x1
jax: 0.10.0
libtpu: 0.0.40
codegen_flags: <defaults>
</compile_context>

<pallas_src>
import functools

import jax
import jax.numpy as jnp
from jax.experimental import pallas as pl
from jax.experimental.pallas import tpu as pltpu


# ----------------------------------------------------------------------------
# small helpers (glue)
# ----------------------------------------------------------------------------
def _round_up(x, m):
    return (x + m - 1) // m * m


def _pad_axis(x, target, axis, value=0.0):
    size = x.shape[axis]
    if size == target:
        return x
    widths = [(0, 0)] * x.ndim
    widths[axis] = (0, target - size)
    return jnp.pad(x, widths, constant_values=value)


def _pick_tile(n, candidates=(512, 256, 128)):
    for c in candidates:
        if n % c == 0:
            return c
    return n


# ----------------------------------------------------------------------------
# Pallas kernel 1: FUSED stride-1 conv
#   A (padded, flattened activation) stays in HBM; each tap is a row-shifted
#   window DMA'd into a double-buffered VMEM scratch and accumulated on MXU.
# ----------------------------------------------------------------------------
def _conv_fused_kernel(a_hbm, b_ref, bias_ref, o_ref,
                       a_buf, sem, acc_ref, *, taps, tm, offsets, relu):
    i = pl.program_id(1)              # M-tile index (inner grid axis)
    row0 = i * tm

    def _start(t, slot):
        pltpu.make_async_copy(
            a_hbm.at[pl.ds(row0 + offsets[t], tm), :],
            a_buf.at[slot], sem.at[slot]).start()

    _start(0, 0)
    for t in range(taps):             # static unroll (taps = k*k <= 9)
        slot = t & 1
        pltpu.make_async_copy(
            a_hbm.at[pl.ds(row0 + offsets[t], tm), :],
            a_buf.at[slot], sem.at[slot]).wait()
        if t + 1 < taps:
            _start(t + 1, 1 - slot)   # prefetch next tap while we matmul
        contrib = jnp.dot(a_buf[slot], b_ref[t],
                          preferred_element_type=jnp.float32)
        if t == 0:
            acc_ref[...] = contrib
        else:
            acc_ref[...] += contrib

    r = acc_ref[...] + bias_ref[...]
    if relu:
        r = jnp.maximum(r, 0.0)
    o_ref[...] = r.astype(o_ref.dtype)


@functools.partial(jax.jit, static_argnames=('k', 'pad', 'dil', 'relu', 'cout'))
def conv2d_fused(x, b_mat, bias, *, k, pad, dil, relu, cout):
    """Stride-1 conv.  x: (N,H,W,C) bf16, b_mat: (k*k, Cp, Np) bf16,
    bias: (1, Np) f32.  Returns (N,Hout,Wout,cout) bf16."""
    N, H, W, C = x.shape
    taps, Cp, Np = b_mat.shape
    Hp, Wp = H + 2 * pad, W + 2 * pad
    Hout = Hp - dil * (k - 1)
    Wout = Wp - dil * (k - 1)

    xp = jnp.pad(x, ((0, 0), (pad, pad), (pad, pad), (0, 0)))
    a = xp.reshape(N * Hp * Wp, C)
    if Cp != C:
        a = _pad_axis(a, Cp, 1)

    M = N * Hp * Wp
    tm = 512 if M >= 512 else _round_up(M, 16)
    Mp = _round_up(M, tm)
    max_off = dil * (k - 1) * Wp + dil * (k - 1)
    a = _pad_axis(a, Mp + max_off, 0)

    tn = _pick_tile(Np)
    offsets = tuple(dy * dil * Wp + dx * dil
                    for dy in range(k) for dx in range(k))

    out = pl.pallas_call(
        functools.partial(_conv_fused_kernel, taps=taps, tm=tm,
                          offsets=offsets, relu=relu),
        out_shape=jax.ShapeDtypeStruct((Mp, Np), jnp.bfloat16),
        grid_spec=pltpu.PrefetchScalarGridSpec(
            num_scalar_prefetch=0,
            grid=(Np // tn, Mp // tm),            # j outer so B is fetched once per j
            in_specs=[
                pl.BlockSpec(memory_space=pl.ANY),                 # A stays in HBM
                pl.BlockSpec((taps, Cp, tn), lambda j, i: (0, 0, j)),
                pl.BlockSpec((1, tn), lambda j, i: (0, j)),
            ],
            out_specs=pl.BlockSpec((tm, tn), lambda j, i: (i, j)),
            scratch_shapes=[
                pltpu.VMEM((2, tm, Cp), jnp.bfloat16),   # double-buffered A taps
                pltpu.SemaphoreType.DMA((2,)),
                pltpu.VMEM((tm, tn), jnp.float32),       # f32 accumulator
            ]),
        compiler_params=pltpu.CompilerParams(
            dimension_semantics=("parallel", "parallel")),
    )(a, b_mat, bias)

    out = out[:M].reshape(N, Hp, Wp, Np)[:, :Hout, :Wout, :cout]
    return out


# ----------------------------------------------------------------------------
# Pallas kernel 2: tiled bf16 matmul + bias (+ fused ReLU), f32 accumulator
# (used for conv1_1, 1x1 convs and the stride-2 extras via im2col)
# ----------------------------------------------------------------------------
def _matmul_bias_kernel(a_ref, b_ref, bias_ref, o_ref, acc_ref, *, relu):
    @pl.when(pl.program_id(2) == 0)
    def _():
        acc_ref[...] = jnp.zeros_like(acc_ref)

    acc_ref[...] += jnp.dot(a_ref[...], b_ref[...],
                            preferred_element_type=jnp.float32)

    @pl.when(pl.program_id(2) == pl.num_programs(2) - 1)
    def _():
        r = acc_ref[...] + bias_ref[...]
        if relu:
            r = jnp.maximum(r, 0.0)
        o_ref[...] = r.astype(o_ref.dtype)


def matmul_bias(a, b, bias, relu):
    """a: (M, K) bf16, b: (Kp, Np) bf16 (pre-padded), bias: (1, Np) f32."""
    M, K = a.shape
    Kp, Np = b.shape
    a = _pad_axis(a, Kp, 1)
    tm = 512 if M >= 512 else _round_up(M, 16)
    Mp = _round_up(M, tm)
    a = _pad_axis(a, Mp, 0)
    tk = _pick_tile(Kp) if Kp % 128 == 0 else Kp   # never over-pad small K
    tn = _pick_tile(Np)

    out = pl.pallas_call(
        functools.partial(_matmul_bias_kernel, relu=relu),
        out_shape=jax.ShapeDtypeStruct((Mp, Np), jnp.bfloat16),
        grid_spec=pltpu.PrefetchScalarGridSpec(
            num_scalar_prefetch=0,
            grid=(Mp // tm, Np // tn, Kp // tk),
            in_specs=[
                pl.BlockSpec((tm, tk), lambda i, j, kk: (i, kk)),
                pl.BlockSpec((tk, tn), lambda i, j, kk: (kk, j)),
                pl.BlockSpec((1, tn), lambda i, j, kk: (0, j)),
            ],
            out_specs=pl.BlockSpec((tm, tn), lambda i, j, kk: (i, j)),
            scratch_shapes=[pltpu.VMEM((tm, tn), jnp.float32)]),
        compiler_params=pltpu.CompilerParams(
            dimension_semantics=("parallel", "parallel", "arbitrary")),
    )(a, b, bias)
    return out[:M]


@functools.partial(jax.jit, static_argnames=('k', 'stride', 'pad', 'relu', 'cout'))
def conv2d_im2col(x, w, bias, *, k, stride, pad, relu, cout):
    N, H, W, C = x.shape
    xp = jnp.pad(x, ((0, 0), (pad, pad), (pad, pad), (0, 0)))
    Hp, Wp = H + 2 * pad, W + 2 * pad
    Hout = (Hp - k) // stride + 1
    Wout = (Wp - k) // stride + 1
    cols = []
    for dy in range(k):
        for dx in range(k):
            patch = xp[:, dy:dy + (Hout - 1) * stride + 1:stride,
                          dx:dx + (Wout - 1) * stride + 1:stride, :]
            cols.append(patch)
    a = jnp.concatenate(cols, axis=-1) if len(cols) > 1 else cols[0]
    a = a.reshape(N * Hout * Wout, k * k * C)
    out = matmul_bias(a, w, bias, relu)
    return out[:, :cout].reshape(N, Hout, Wout, cout)


# ----------------------------------------------------------------------------
# Pallas kernel 3: max over pooling-window taps
# ----------------------------------------------------------------------------
def _max_over_taps_kernel(x_ref, o_ref):
    o_ref[...] = jnp.max(x_ref[...], axis=0)


def _max_over_taps(taps_stacked):
    T, M, C = taps_stacked.shape
    tm = 512 if M >= 512 else _round_up(M, 16)
    Mp = _round_up(M, tm)
    x = _pad_axis(taps_stacked, Mp, 1)
    out = pl.pallas_call(
        _max_over_taps_kernel,
        out_shape=jax.ShapeDtypeStruct((Mp, C), taps_stacked.dtype),
        grid_spec=pltpu.PrefetchScalarGridSpec(
            num_scalar_prefetch=0,
            grid=(Mp // tm,),
            in_specs=[pl.BlockSpec((T, tm, C), lambda i: (0, i, 0))],
            out_specs=pl.BlockSpec((tm, C), lambda i: (i, 0))),
        compiler_params=pltpu.CompilerParams(
            dimension_semantics=("arbitrary",)),
    )(x)
    return out[:M]


@functools.partial(jax.jit, static_argnames=('ceil_mode',))
def maxpool_2x2(x, *, ceil_mode=False):
    N, H, W, C = x.shape
    if ceil_mode:
        ph, pw = H % 2, W % 2
        if ph or pw:
            x = jnp.pad(x, ((0, 0), (0, ph), (0, pw), (0, 0)),
                        constant_values=-jnp.inf)
    else:
        x = x[:, :(H // 2) * 2, :(W // 2) * 2, :]
    Ho, Wo = x.shape[1] // 2, x.shape[2] // 2
    taps = jnp.stack([x[:, 0::2, 0::2, :].reshape(-1, C),
                      x[:, 0::2, 1::2, :].reshape(-1, C),
                      x[:, 1::2, 0::2, :].reshape(-1, C),
                      x[:, 1::2, 1::2, :].reshape(-1, C)], axis=0)
    return _max_over_taps(taps).reshape(N, Ho, Wo, C)


@jax.jit
def maxpool_3x3_s1_p1(x):
    N, H, W, C = x.shape
    xp = jnp.pad(x, ((0, 0), (1, 1), (1, 1), (0, 0)),
                 constant_values=-jnp.inf)
    taps = jnp.stack([xp[:, dy:dy + H, dx:dx + W, :].reshape(-1, C)
                      for dy in range(3) for dx in range(3)], axis=0)
    return _max_over_taps(taps).reshape(N, H, W, C)


# ----------------------------------------------------------------------------
# Pallas kernel 4: L2Norm (channel-wise L2 normalization * learned scale)
# ----------------------------------------------------------------------------
def _l2norm_kernel(x_ref, w_ref, o_ref):
    x = x_ref[...].astype(jnp.float32)
    ss = jnp.sum(x * x, axis=-1, keepdims=True)
    norm = jnp.sqrt(ss) + 1e-10
    o_ref[...] = ((x / norm) * w_ref[...]).astype(o_ref.dtype)


@jax.jit
def l2norm(x, weight):
    N, H, W, C = x.shape
    M = N * H * W
    tm = 512 if M >= 512 else _round_up(M, 16)
    Mp = _round_up(M, tm)
    x2 = _pad_axis(x.reshape(M, C), Mp, 0)
    out = pl.pallas_call(
        _l2norm_kernel,
        out_shape=jax.ShapeDtypeStruct((Mp, C), x.dtype),
        grid_spec=pltpu.PrefetchScalarGridSpec(
            num_scalar_prefetch=0,
            grid=(Mp // tm,),
            in_specs=[pl.BlockSpec((tm, C), lambda i: (i, 0)),
                      pl.BlockSpec((1, C), lambda i: (0, 0))],
            out_specs=pl.BlockSpec((tm, C), lambda i: (i, 0))),
        compiler_params=pltpu.CompilerParams(
            dimension_semantics=("arbitrary",)),
    )(x2, weight.reshape(1, C).astype(jnp.float32))
    return out[:M].reshape(N, H, W, C)


# ----------------------------------------------------------------------------
# parameter construction (deterministic He-normal) + weight pre-lowering
# ----------------------------------------------------------------------------
def _init_conv(key, cin, cout, k):
    kw_, kb = jax.random.split(key)
    std = (2.0 / (k * k * cin)) ** 0.5
    w = jax.random.normal(kw_, (k, k, cin, cout), jnp.float32) * std
    b = jax.random.normal(kb, (cout,), jnp.float32) * 0.01
    return w.reshape(k * k * cin, cout), b          # taps ordered (dy, dx, cin)


def _prep_fused(w, b, k, cin, cout):
    Cp = _round_up(cin, 128)
    Np = _round_up(cout, 128)
    wm = w.reshape(k * k, cin, cout)
    wm = jnp.pad(wm, ((0, 0), (0, Cp - cin), (0, Np - cout))).astype(jnp.bfloat16)
    bm = jnp.pad(b, (0, Np - cout)).reshape(1, Np).astype(jnp.float32)
    return wm, bm


def _prep_matmul(w, b, cout):
    K = w.shape[0]
    Kp = _round_up(K, 128) if K >= 128 else _round_up(K, 8)
    Np = _round_up(cout, 128)
    wm = jnp.pad(w, ((0, Kp - K), (0, Np - cout))).astype(jnp.bfloat16)
    bm = jnp.pad(b, (0, Np - cout)).reshape(1, Np).astype(jnp.float32)
    return wm, bm


def build_params(key, num_classes=10):
    keys = iter(jax.random.split(key, 64))

    def make_conv(cin, cout, k, stride=1, pad=0, dil=1, relu=True):
        w, b = _init_conv(next(keys), cin, cout, k)
        if stride == 1 and k >= 3 and cin >= 64:           # fused path
            wm, bm = _prep_fused(w, b, k, cin, cout)
            return dict(kind='fused', w=wm, b=bm, k=k, pad=pad, dil=dil,
                        relu=relu, cout=cout)
        wm, bm = _prep_matmul(w, b, cout)                  # im2col/matmul path
        return dict(kind='im2col', w=wm, b=bm, k=k, stride=stride, pad=pad,
                    relu=relu, cout=cout)

    # VGG base, indices match the PyTorch nn.ModuleList exactly
    vgg_cfg = [64, 64, 'M', 128, 128, 'M', 256, 256, 256, 'C',
               512, 512, 512, 'M', 512, 512, 512]
    vgg_ops = []
    in_ch = 3
    for v in vgg_cfg:
        if v == 'M':
            vgg_ops.append(('pool2', False))
        elif v == 'C':
            vgg_ops.append(('pool2', True))                # ceil_mode pool
        else:
            vgg_ops.append(('conv', make_conv(in_ch, v, 3, 1, 1, 1, True)))
            vgg_ops.append(('noop', None))                 # ReLU fused into conv
            in_ch = v
    # appended: MaxPool(3,1,1), dilated conv 512->1024, ReLU, 1x1 1024, ReLU
    vgg_ops.append(('pool3', None))
    vgg_ops.append(('conv', make_conv(512, 1024, 3, 1, 6, 6, True)))
    vgg_ops.append(('noop', None))
    vgg_ops.append(('conv', make_conv(1024, 1024, 1, 1, 0, 1, True)))
    vgg_ops.append(('noop', None))

    # extras (follows add_extra_layer exactly, including the flag=True start)
    structs = [256, 'S', 512, 128, 'S', 256, 128, 256, 128, 256]
    extras = []
    in_ch = 1024
    flag = True
    for kidx, v in enumerate(structs):
        if in_ch != 'S':
            ksz = 3 if flag else 1
            if v == 'S':
                extras.append(make_conv(in_ch, structs[kidx + 1], ksz,
                                        stride=2, pad=1, relu=True))
            else:
                extras.append(make_conv(in_ch, v, ksz,
                                        stride=1, pad=0, relu=True))
            flag = not flag
        in_ch = v

    # loc / conf heads, fused per source (shared im2col, one matmul)
    mboxs = [4, 6, 6, 6, 4, 4]
    src_ch = [512, 1024, 512, 256, 256, 256]
    heads = []
    for mb, cin in zip(mboxs, src_ch):
        wl, bl = _init_conv(next(keys), cin, mb * 4, 3)
        wc, bc = _init_conv(next(keys), cin, mb * num_classes, 3)
        w = jnp.concatenate([wl, wc], axis=1)
        b = jnp.concatenate([bl, bc], axis=0)
        cout = mb * (4 + num_classes)
        wm, bm = _prep_fused(w, b, 3, cin, cout)
        heads.append(dict(kind='fused', w=wm, b=bm, k=3, pad=1, dil=1,
                          relu=False, cout=cout, loc_ch=mb * 4))

    return dict(vgg=vgg_ops, extras=extras, heads=heads,
                l2norm_w=jnp.full((512,), 20.0, jnp.float32),
                num_classes=num_classes)


# ----------------------------------------------------------------------------
# forward pass (phase='train')
# ----------------------------------------------------------------------------
def apply_conv(p, x):
    if p['kind'] == 'fused':
        return conv2d_fused(x, p['w'], p['b'], k=p['k'], pad=p['pad'],
                            dil=p['dil'], relu=p['relu'], cout=p['cout'])
    return conv2d_im2col(x, p['w'], p['b'], k=p['k'], stride=p['stride'],
                         pad=p['pad'], relu=p['relu'], cout=p['cout'])


def _run_vgg(ops, x, lo, hi):
    for idx in range(lo, hi):
        kind, p = ops[idx]
        if kind == 'conv':
            x = apply_conv(p, x)
        elif kind == 'pool2':
            x = maxpool_2x2(x, ceil_mode=p)
        elif kind == 'pool3':
            x = maxpool_3x3_s1_p1(x)
        # 'noop' = ReLU already fused into the preceding conv kernel
    return x


def ssd_forward(params, x_nchw):
    # TODO(synk): phase == 'test' branch returns None in the reference; only
    # the 'train' output tuple is implemented here.
    x = jnp.transpose(x_nchw, (0, 2, 3, 1)).astype(jnp.bfloat16)  # NCHW -> NHWC
    ops = params['vgg']
    sources = []

    x = _run_vgg(ops, x, 0, 23)
    sources.append(l2norm(x, params['l2norm_w']))
    x = _run_vgg(ops, x, 23, len(ops))
    sources.append(x)

    for k, p in enumerate(params['extras']):
        x = apply_conv(p, x)                 # ReLU fused in-kernel
        if k % 2 == 1:
            sources.append(x)

    locs, confs = [], []
    for src, hp in zip(sources, params['heads']):
        y = apply_conv(hp, src)              # fused loc+conf head
        l = y[..., :hp['loc_ch']]
        c = y[..., hp['loc_ch']:]
        locs.append(l.reshape(l.shape[0], -1))   # NHWC flatten == permute(0,2,3,1)
        confs.append(c.reshape(c.shape[0], -1))

    loc = jnp.concatenate(locs, axis=1).astype(jnp.float32)
    conf = jnp.concatenate(confs, axis=1).astype(jnp.float32)
    B = loc.shape[0]
    return (loc.reshape(B, -1, 4),
            conf.reshape(B, -1, params['num_classes']))


# ----------------------------------------------------------------------------
if __name__ == "__main__":
    key = jax.random.PRNGKey(0)
    pkey, xkey = jax.random.split(key)

    params = build_params(pkey, num_classes=10)
    x = jax.random.normal(xkey, (1, 3, 300, 300), jnp.float32)

    loc, conf = ssd_forward(params, x)
    jax.block_until_ready((loc, conf))

    assert loc.shape == (1, 8732, 4), loc.shape
    assert conf.shape == (1, 8732, 10), conf.shape
    assert bool(jnp.all(jnp.isfinite(loc))) and bool(jnp.all(jnp.isfinite(conf)))

    print("KERNEL_OK")
</pallas_src>

<mosaic_0001>
module attributes {stable_mosaic.version = 11 : i64} {
  func.func @_matmul_bias_kernel(%arg0: i32, %arg1: i32, %arg2: i32, %arg3: memref<512x32xbf16, #tpu.memory_space<vmem>>, %arg4: memref<32x128xbf16, #tpu.memory_space<vmem>>, %arg5: memref<1x128xf32, #tpu.memory_space<vmem>>, %arg6: memref<512x128xbf16, #tpu.memory_space<vmem>>, %arg7: memref<512x128xf32, #tpu.memory_space<vmem>>) attributes {dimension_semantics = [#tpu.dimension_semantics<parallel>, #tpu.dimension_semantics<parallel>, #tpu.dimension_semantics<arbitrary>], iteration_bounds = array<i64: 176, 1, 1>, scalar_prefetch = 0 : i64, scratch_operands = 1 : i64, tpu.core_type = #tpu.core_type<tc>, window_params = [{transform_indices = @transform_0, window_bounds = array<i64: 512, 32>}, {transform_indices = @transform_1, window_bounds = array<i64: 32, 128>}, {transform_indices = @transform_2, window_bounds = array<i64: 1, 128>}, {transform_indices = @transform_3, window_bounds = array<i64: 512, 128>}]} {
    %c0_i32 = arith.constant 0 : i32
    %0 = arith.cmpi eq, %arg2, %c0_i32 : i32
    %1 = arith.extui %0 : i1 to i32
    %c0_i32_0 = arith.constant 0 : i32
    %2 = arith.cmpi ne, %1, %c0_i32_0 : i32
    scf.if %2 {
      %cst_10 = arith.constant 0.000000e+00 : f32
      %12 = vector.broadcast %cst_10 : f32 to vector<512x128xf32>
      %c0_11 = arith.constant 0 : index
      %c0_12 = arith.constant 0 : index
      %13 = vector.load %arg7[%c0_11, %c0_12] : memref<512x128xf32, #tpu.memory_space<vmem>>, vector<512x128xf32>
      tpu.vector_store %arg7[%c0_11, %c0_12], %12 {strides = array<i32>} : memref<512x128xf32, #tpu.memory_space<vmem>>, vector<512x128xf32>,
    } else {
    }
    %c0 = arith.constant 0 : index
    %c0_1 = arith.constant 0 : index
    %3 = vector.load %arg7[%c0, %c0_1] : memref<512x128xf32, #tpu.memory_space<vmem>>, vector<512x128xf32>
    %c0_2 = arith.constant 0 : index
    %c0_3 = arith.constant 0 : index
    %4 = vector.load %arg3[%c0_2, %c0_3] : memref<512x32xbf16, #tpu.memory_space<vmem>>, vector<512x32xbf16>
    %c0_4 = arith.constant 0 : index
    %c0_5 = arith.constant 0 : index
    %5 = vector.load %arg4[%c0_4, %c0_5] : memref<32x128xbf16, #tpu.memory_space<vmem>>, vector<32x128xbf16>
    %cst = arith.constant dense<0.000000e+00> : vector<512x128xf32>
    %6 = tpu.matmul %4, %5, %cst {dimension_numbers = #tpu.dot_dimension_numbers<[1], [0], [0], [1], [0, 0, 1, 1], [], []>} : vector<512x32xbf16>, vector<32x128xbf16>, vector<512x128xf32> -> vector<512x128xf32>
    %7 = arith.addf %3, %6 : vector<512x128xf32>
    %c0_6 = arith.constant 0 : index
    %c0_7 = arith.constant 0 : index
    %8 = vector.load %arg7[%c0_6, %c0_7] : memref<512x128xf32, #tpu.memory_space<vmem>>, vector<512x128xf32>
    tpu.vector_store %arg7[%c0_6, %c0_7], %7 {strides = array<i32>} : memref<512x128xf32, #tpu.memory_space<vmem>>, vector<512x128xf32>,
    %c0_i32_8 = arith.constant 0 : i32
    %9 = arith.cmpi eq, %arg2, %c0_i32_8 : i32
    %10 = arith.extui %9 : i1 to i32
    %c0_i32_9 = arith.constant 0 : i32
    %11 = arith.cmpi ne, %10, %c0_i32_9 : i32
    scf.if %11 {
      %c0_10 = arith.constant 0 : index
      %c0_11 = arith.constant 0 : index
      %12 = vector.load %arg7[%c0_10, %c0_11] : memref<512x128xf32, #tpu.memory_space<vmem>>, vector<512x128xf32>
      %c0_12 = arith.constant 0 : index
      %c0_13 = arith.constant 0 : index
      %13 = vector.load %arg5[%c0_12, %c0_13] : memref<1x128xf32, #tpu.memory_space<vmem>>, vector<1x128xf32>
      %14 = vector.broadcast %13 : vector<1x128xf32> to vector<512x128xf32>
      %15 = arith.addf %12, %14 : vector<512x128xf32>
      %cst_14 = arith.constant 0.000000e+00 : f32
      %16 = vector.broadcast %cst_14 : f32 to vector<512x128xf32>
      %17 = arith.maximumf %15, %16 : vector<512x128xf32>
      %18 = arith.truncf %17 : vector<512x128xf32> to vector<512x128xbf16>
      %c0_15 = arith.constant 0 : index
      %c0_16 = arith.constant 0 : index
      %19 = vector.load %arg6[%c0_15, %c0_16] : memref<512x128xbf16, #tpu.memory_space<vmem>>, vector<512x128xbf16>
      tpu.vector_store %arg6[%c0_15, %c0_16], %18 {strides = array<i32>} : memref<512x128xbf16, #tpu.memory_space<vmem>>, vector<512x128xbf16>,
    } else {
    }
    return
  }
  func.func @transform_0(%arg0: i32, %arg1: i32, %arg2: i32) -> (i32, i32) {
    %c0_i32 = arith.constant 0 : i32
    return %arg0, %arg2 : i32, i32
  }
  func.func @transform_1(%arg0: i32, %arg1: i32, %arg2: i32) -> (i32, i32) {
    %c0_i32 = arith.constant 0 : i32
    return %arg2, %arg1 : i32, i32
  }
  func.func @transform_2(%arg0: i32, %arg1: i32, %arg2: i32) -> (i32, i32) {
    %c0_i32 = arith.constant 0 : i32
    %c0_i32_0 = arith.constant 0 : i32
    return %c0_i32, %arg1 : i32, i32
  }
  func.func @transform_3(%arg0: i32, %arg1: i32, %arg2: i32) -> (i32, i32) {
    %c0_i32 = arith.constant 0 : i32
    return %arg0, %arg1 : i32, i32
  }
}

</mosaic_0001>

<llo_original>
// kernel: conv2d_im2col.1
$region0: #{conv2d_im2col.1}
  #allocation0 [shape = 'u32[]', space=smem, size = 0x4, offset = 0x4, fixed_abs, tag = 'smem constant byte address 0x4 - core index']
  #allocation1 [shape = 'u32[144,128]{1,0:T(1,128)}', space=vmem, size = 0x12000, scoped, tag = 'internal scratch']
  #allocation2 [shape = 'f32[512,128]{1,0:T(8,128)}', space=vmem, size = 0x40000, scoped, tag = 'scratch operand']
  %s0 = inlined_call_operand.vmem [shape: bf16[90112,32], index: 0, kind: input, shape index: {}]
  %s1 = inlined_call_operand.vmem [shape: bf16[32,128], index: 1, kind: input, shape index: {}]
  %s2 = inlined_call_operand.vmem [shape: f32[1,128], index: 2, kind: input, shape index: {}]
  %s3 = inlined_call_operand.hbm [shape: bf16[90112,128], index: 3, kind: output, shape index: {}]
  %s4 = sld [smem:[#allocation0]]
  $region53: #{conv2d_im2col.1} parent=0
    _
  %s6 = ssub.s32 1, %s4
  %s7 = scalar_select 0, %s6, %s4
  $region1: #{conv2d_im2col.1} parent=0
    #allocation3 [shape = 'u8[262144]{0}', space=vmem, size = 0x40000, scoped, tag = 'output window, operand 0']
    #allocation4 [shape = 's32[2]{0}', space=sflag, size = 0x8, scoped, tag = 'scoped memory for conv2d_im2col.1']
    %8 = vsyncpa [#allocation4], 0
    %s9 = scalar_lea.sflag [#allocation4], 1
    %10 = vsyncpa %s9, 0
    loop: start=0, step=1, limit=178
    $region2: #{conv2d_im2col.1} parent=1 // loop_pre_header
      _
    $region3: #{conv2d_im2col.1} parent=1 // loop_header
      %s12 = sphi 0, %s16
      %p13 = scmp.ge.s32.totalorder %s12, 178
      %s19 = sphi 0, %s38
      %s20 = sphi 0, %s34
      %s21 = sphi 0, %s30
      %s22 = sphi 0, %s19
      %s23 = sphi 0, %s20
      %s24 = sphi 0, %s21
      %s25 = sphi 0, %s22
      %s26 = sphi 0, %s23
      %s27 = sphi 0, %s24
      %s43 = sphi 0, %s45
      %s46 = sphi 0, %s43
      %s47 = sphi 0, %s46
      %s63 = sphi 0, %s47
      %s71 = sphi 0, %s73
      %s74 = sphi 0, %s71
      %s75 = sphi 0, %s74
      %s91 = sphi 0, %s75
      %s97 = sphi 0, %s99
      %s100 = sphi 0, %s97
      %s101 = sphi 0, %s100
      %s117 = sphi 0, %s101
      %s125 = sphi 0, %s127
      %s128 = sphi 0, %s125
      %s129 = sphi 0, %s128
      %s145 = sphi 0, %s129
    $region4: #{conv2d_im2col.1} parent=1 // loop_header_branch
      %15 = sbr.rel (%p13) target = $region8
    $region5: #{conv2d_im2col.1} parent=1 // loop_body
      %s17 = ssub.s32 %s12, 1
      %s18 = ssub.s32 %s12, 2
      %s28 = sadd.s32 1, %s21
      %p29 = scmp.ge.s32.totalorder %s28, 1
      %s30 = scalar_select %p29, 0, %s28
      %s31 = sadd.s32 1, %s20
      %s32 = scalar_select %p29, %s31, %s20
      %p33 = scmp.ge.s32.totalorder %s32, 1
      %s34 = scalar_select %p33, 0, %s32
      %s35 = sadd.s32 1, %s19
      %s36 = scalar_select %p33, %s35, %s19
      %p37 = scmp.ge.s32.totalorder %s36, 176
      %s38 = scalar_select %p37, 0, %s36
      %s39 = ssub.s32 %s19, %s38
      %s40 = ssub.s32 %s21, %s30
      %s41 = sor.u32 %s39, %s40
      %p42 = scmp.eq.s32.totalorder %s41, 0
      %s44 = sadd.s32 %s43, 1
      %s45 = scalar_select %p42, %s43, %s44
      %p48 = pneg %p42
      %p49 = scmp.eq.s32.totalorder %s12, 175
      %p50 = por %p48, %p49
      %p51 = scmp.ne.s32.totalorder %s43, %s46
      %p52 = scmp.eq.s32.totalorder %s12, 0
      %p53 = por %p51, %p52
      %p54 = scmp.ne.s32.totalorder %s43, %s46
      %p55 = scmp.eq.s32.totalorder %s17, 175
      %p56 = por %p54, %p55
      %p57 = scmp.ne.s32.totalorder %s46, %s47
      %p58 = scmp.eq.s32.totalorder %s17, 0
      %p59 = por %p57, %p58
      %p60 = scmp.ne.s32.totalorder %s46, %s47
      %p61 = scmp.eq.s32.totalorder %s18, 175
      %p62 = por %p60, %p61
      %p64 = scmp.ne.s32.totalorder %s47, %s63
      %p65 = scmp.eq.s32.totalorder %s18, 0
      %p66 = por %p64, %p65
      %s67 = ssub.s32 %s21, %s30
      %s68 = ssub.s32 %s20, %s34
      %s69 = sor.u32 %s67, %s68
      %p70 = scmp.eq.s32.totalorder %s69, 0
      %s72 = sadd.s32 %s71, 1
      %s73 = scalar_select %p70, %s71, %s72
      %p76 = pneg %p70
      %p77 = scmp.eq.s32.totalorder %s12, 175
      %p78 = por %p76, %p77
      %p79 = scmp.ne.s32.totalorder %s71, %s74
      %p80 = scmp.eq.s32.totalorder %s12, 0
      %p81 = por %p79, %p80
      %p82 = scmp.ne.s32.totalorder %s71, %s74
      %p83 = scmp.eq.s32.totalorder %s17, 175
      %p84 = por %p82, %p83
      %p85 = scmp.ne.s32.totalorder %s74, %s75
      %p86 = scmp.eq.s32.totalorder %s17, 0
      %p87 = por %p85, %p86
      %p88 = scmp.ne.s32.totalorder %s74, %s75
      %p89 = scmp.eq.s32.totalorder %s18, 175
      %p90 = por %p88, %p89
      %p92 = scmp.ne.s32.totalorder %s75, %s91
      %p93 = scmp.eq.s32.totalorder %s18, 0
      %p94 = por %p92, %p93
      %s95 = ssub.s32 %s20, %s34
      %p96 = scmp.eq.s32.totalorder %s95, 0
      %s98 = sadd.s32 %s97, 1
      %s99 = scalar_select %p96, %s97, %s98
      %p102 = pneg %p96
      %p103 = scmp.eq.s32.totalorder %s12, 175
      %p104 = por %p102, %p103
      %p105 = scmp.ne.s32.totalorder %s97, %s100
      %p106 = scmp.eq.s32.totalorder %s12, 0
      %p107 = por %p105, %p106
      %p108 = scmp.ne.s32.totalorder %s97, %s100
      %p109 = scmp.eq.s32.totalorder %s17, 175
      %p110 = por %p108, %p109
      %p111 = scmp.ne.s32.totalorder %s100, %s101
      %p112 = scmp.eq.s32.totalorder %s17, 0
      %p113 = por %p111, %p112
      %p114 = scmp.ne.s32.totalorder %s100, %s101
      %p115 = scmp.eq.s32.totalorder %s18, 175
      %p116 = por %p114, %p115
      %p118 = scmp.ne.s32.totalorder %s101, %s117
      %p119 = scmp.eq.s32.totalorder %s18, 0
      %p120 = por %p118, %p119
      %s121 = ssub.s32 %s19, %s38
      %s122 = ssub.s32 %s20, %s34
      %s123 = sor.u32 %s121, %s122
      %p124 = scmp.eq.s32.totalorder %s123, 0
      %s126 = sadd.s32 %s125, 1
      %s127 = scalar_select %p124, %s125, %s126
      %p130 = pneg %p124
      %p131 = scmp.eq.s32.totalorder %s12, 175
      %p132 = por %p130, %p131
      %p133 = scmp.ne.s32.totalorder %s125, %s128
      %p134 = scmp.eq.s32.totalorder %s12, 0
      %p135 = por %p133, %p134
      %p136 = scmp.ne.s32.totalorder %s125, %s128
      %p137 = scmp.eq.s32.totalorder %s17, 175
      %p138 = por %p136, %p137
      %p139 = scmp.ne.s32.totalorder %s128, %s129
      %p140 = scmp.eq.s32.totalorder %s17, 0
      %p141 = por %p139, %p140
      %p142 = scmp.ne.s32.totalorder %s128, %s129
      %p143 = scmp.eq.s32.totalorder %s18, 175
      %p144 = por %p142, %p143
      %p146 = scmp.ne.s32.totalorder %s129, %s145
      %p147 = scmp.eq.s32.totalorder %s18, 0
      %p148 = por %p146, %p147
      %p149 = scmp.le.s32.totalorder 1, %s12
      %p150 = scmp.lt.s32.totalorder %s12, 177
      %p151 = pnand %p149, %p150
      %p152 = pneg %p151
      // Predicated region
      $region9: #{conv2d_im2col.1} parent=5 // pred_check
        _
      $region10: #{conv2d_im2col.1} parent=5 // pred_check_branch
        %154 = sbr.rel (%p151) target = $region12
      $region11: #{conv2d_im2col.1} parent=5 // pred_region
        %s155 = ssub.s32 %s12, 1
        // Predicated region
        $region13: #{conv2d_im2col.1} parent=11 // pred_check
          %p156 = pneg %p87
        $region14: #{conv2d_im2col.1} parent=11 // pred_check_branch
          %158 = sbr.rel (%p156) target = $region16
        $region15: #{conv2d_im2col.1} parent=11 // pred_region
          %s159 = smul.u32 4, %s24
          %p160 = scmp.lt.s32.totalorder %s159, 3
          %s161 = scalar_select %p160, %s159, 3
          %p162 = scmp.lt.s32.totalorder %s23, 0
          %s163 = scalar_select %p162, %s23, 0
          %s164 = sadd.s32 %s163, %s161
          %s165 = smul.addr %s164, 4
          %s166 = scalar_lea.vmem %s1, %s165
          %s167 = smul.u32 4, %s24
        $region16: #{conv2d_im2col.1} parent=11 // pred_fallthru
          _
        // Predicated region
        $region17: #{conv2d_im2col.1} parent=11 // pred_check
          %p168 = pneg %p113
        $region18: #{conv2d_im2col.1} parent=11 // pred_check_branch
          %170 = sbr.rel (%p168) target = $region20
        $region19: #{conv2d_im2col.1} parent=11 // pred_region
          %p171 = scmp.lt.s32.totalorder %s23, 0
          %s172 = scalar_select %p171, %s23, 0
          %s173 = scalar_lea.vmem %s2, %s172
        $region20: #{conv2d_im2col.1} parent=11 // pred_fallthru
          _
      $region12: #{conv2d_im2col.1} parent=5 // pred_fallthru
        _
      %p174 = scmp.lt.s32.totalorder %s12, 176
      // Predicated region
      $region21: #{conv2d_im2col.1} parent=5 // pred_check
        %p175 = pneg %p174
      $region22: #{conv2d_im2col.1} parent=5 // pred_check_branch
        %177 = sbr.rel (%p175) target = $region24
      $region23: #{conv2d_im2col.1} parent=5 // pred_region
        // Predicated region
        $region25: #{conv2d_im2col.1} parent=23 // pred_check
          %p178 = pneg %p53
        $region26: #{conv2d_im2col.1} parent=23 // pred_check_branch
          %180 = sbr.rel (%p178) target = $region28
        $region27: #{conv2d_im2col.1} parent=23 // pred_region
          %s181 = smul.u32 64, %s19
          %p182 = scmp.lt.s32.totalorder %s181, 11263
          %s183 = scalar_select %p182, %s181, 11263
          %p184 = scmp.lt.s32.totalorder %s21, 0
          %s185 = scalar_select %p184, %s21, 0
          %s186 = sadd.s32 %s185, %s183
          %s187 = smul.addr %s186, 4
          %s188 = scalar_lea.vmem %s0, %s187
          %s189 = smul.u32 64, %s19
        $region28: #{conv2d_im2col.1} parent=23 // pred_fallthru
          _
      $region24: #{conv2d_im2col.1} parent=5 // pred_fallthru
        _
      %p190 = scmp.le.s32.totalorder 1, %s12
      %p191 = scmp.lt.s32.totalorder %s12, 177
      %p192 = pnand %p190, %p191
      %p193 = pneg %p192
      // Predicated region
      $region29: #{conv2d_im2col.1} parent=5 // pred_check
        _
      $region30: #{conv2d_im2col.1} parent=5 // pred_check_branch
        %195 = sbr.rel (%p192) target = $region32
      $region31: #{conv2d_im2col.1} parent=5 // pred_region
        %s196 = ssub.s32 %s12, 1
        %s197 = smul.u32 64, %s22
        %p198 = scmp.lt.s32.totalorder %s197, 11263
        %s199 = scalar_select %p198, %s197, 11263
        %p200 = scmp.lt.s32.totalorder %s24, 0
        %s201 = scalar_select %p200, %s24, 0
        %s202 = sadd.s32 %s201, %s199
        %s203 = smul.addr %s202, 4
        %s204 = scalar_lea.vmem %s0, %s203
        %p205 = pneg %p59
        %p206 = pneg %p56
        %s207 = smul.u32 4, %s24
        %p208 = scmp.lt.s32.totalorder %s207, 3
        %s209 = scalar_select %p208, %s207, 3
        %p210 = scmp.lt.s32.totalorder %s23, 0
        %s211 = scalar_select %p210, %s23, 0
        %s212 = sadd.s32 %s211, %s209
        %s213 = smul.addr %s212, 4
        %s214 = scalar_lea.vmem %s1, %s213
        %p215 = pneg %p87
        %p216 = pneg %p84
        %p217 = scmp.lt.s32.totalorder %s23, 0
        %s218 = scalar_select %p217, %s23, 0
        %s219 = scalar_lea.vmem %s2, %s218
        %p220 = pneg %p113
        %p221 = pneg %p110
        %p222 = pneg %p141
        %p223 = pneg %p138
        %s224 = sand.u32 %s128, 1
        %s225 = scalar_lea.sflag [#allocation4], %s224
        %s226 = sand.u32 %s128, 1
        %s227 = smul.addr %s226, 256
        %s228 = scalar_lea.vmem [#allocation3], %s227
        %s229 = smul.u32 64, %s22
        %p230 = scmp.lt.s32.totalorder %s229, 11263
        %s231 = scalar_select %p230, %s229, 11263
        %p232 = scmp.lt.s32.totalorder %s24, 0
        %s233 = scalar_select %p232, %s24, 0
        %s234 = sadd.s32 %s233, %s231
        %s235 = smul.addr %s234, 4
        %s236 = scalar_lea.vmem %s0, %s235
        %s237 = smul.u32 64, %s22
        %s238 = smul.u32 4, %s24
        %p239 = scmp.lt.s32.totalorder %s238, 3
        %s240 = scalar_select %p239, %s238, 3
        %p241 = scmp.lt.s32.totalorder %s23, 0
        %s242 = scalar_select %p241, %s23, 0
        %s243 = sadd.s32 %s242, %s240
        %s244 = smul.addr %s243, 4
        %s245 = scalar_lea.vmem %s1, %s244
        %s246 = smul.u32 4, %s24
        %p247 = scmp.lt.s32.totalorder %s23, 0
        %s248 = scalar_select %p247, %s23, 0
        %s249 = scalar_lea.vmem %s2, %s248
        %s250 = smul.u32 64, %s22
        %p252 = scmp.eq.s32.totalorder %s24, 0
        // Predicated region
        $region33: #{conv2d_im2col.1} parent=31 // pred_check
          %p253 = pneg %p252
        $region34: #{conv2d_im2col.1} parent=31 // pred_check_branch
          %255 = sbr.rel (%p253) target = $region36
        $region35: #{conv2d_im2col.1} parent=31 // pred_region
          %256 = vst [vmem:[#allocation2] sm:$0xff] 0.0
          %257 = vst [vmem:[#allocation2 + $0x8] sm:$0xff] 0.0
          %258 = vst [vmem:[#allocation2 + $0x10] sm:$0xff] 0.0
          %259 = vst [vmem:[#allocation2 + $0x18] sm:$0xff] 0.0
          %260 = vst [vmem:[#allocation2 + $0x20] sm:$0xff] 0.0
          %261 = vst [vmem:[#allocation2 + $0x28] sm:$0xff] 0.0
          %262 = vst [vmem:[#allocation2 + $0x30] sm:$0xff] 0.0
          %263 = vst [vmem:[#allocation2 + $0x38] sm:$0xff] 0.0
          %264 = vst [vmem:[#allocation2 + $0x40] sm:$0xff] 0.0
          %265 = vst [vmem:[#allocation2 + $0x48] sm:$0xff] 0.0
          %266 = vst [vmem:[#allocation2 + $0x50] sm:$0xff] 0.0
          %267 = vst [vmem:[#allocation2 + $0x58] sm:$0xff] 0.0
          %268 = vst [vmem:[#allocation2 + $0x60] sm:$0xff] 0.0
          %269 = vst [vmem:[#allocation2 + $0x68] sm:$0xff] 0.0
          %270 = vst [vmem:[#allocation2 + $0x70] sm:$0xff] 0.0
          %271 = vst [vmem:[#allocation2 + $0x78] sm:$0xff] 0.0
          %272 = vst [vmem:[#allocation2 + $0x80] sm:$0xff] 0.0
          %273 = vst [vmem:[#allocation2 + $0x88] sm:$0xff] 0.0
          %274 = vst [vmem:[#allocation2 + $0x90] sm:$0xff] 0.0
          %275 = vst [vmem:[#allocation2 + $0x98] sm:$0xff] 0.0
          %276 = vst [vmem:[#allocation2 + $0xa0] sm:$0xff] 0.0
          %277 = vst [vmem:[#allocation2 + $0xa8] sm:$0xff] 0.0
          %278 = vst [vmem:[#allocation2 + $0xb0] sm:$0xff] 0.0
          %279 = vst [vmem:[#allocation2 + $0xb8] sm:$0xff] 0.0
          %280 = vst [vmem:[#allocation2 + $0xc0] sm:$0xff] 0.0
          %281 = vst [vmem:[#allocation2 + $0xc8] sm:$0xff] 0.0
          %282 = vst [vmem:[#allocation2 + $0xd0] sm:$0xff] 0.0
          %283 = vst [vmem:[#allocation2 + $0xd8] sm:$0xff] 0.0
          %284 = vst [vmem:[#allocation2 + $0xe0] sm:$0xff] 0.0
          %285 = vst [vmem:[#allocation2 + $0xe8] sm:$0xff] 0.0
          %286 = vst [vmem:[#allocation2 + $0xf0] sm:$0xff] 0.0
          %287 = vst [vmem:[#allocation2 + $0xf8] sm:$0xff] 0.0
          %288 = vst [vmem:[#allocation2 + $0x100] sm:$0xff] 0.0
          %289 = vst [vmem:[#allocation2 + $0x108] sm:$0xff] 0.0
          %290 = vst [vmem:[#allocation2 + $0x110] sm:$0xff] 0.0
          %291 = vst [vmem:[#allocation2 + $0x118] sm:$0xff] 0.0
          %292 = vst [vmem:[#allocation2 + $0x120] sm:$0xff] 0.0
          %293 = vst [vmem:[#allocation2 + $0x128] sm:$0xff] 0.0
          %294 = vst [vmem:[#allocation2 + $0x130] sm:$0xff] 0.0
          %295 = vst [vmem:[#allocation2 + $0x138] sm:$0xff] 0.0
          %296 = vst [vmem:[#allocation2 + $0x140] sm:$0xff] 0.0
          %297 = vst [vmem:[#allocation2 + $0x148] sm:$0xff] 0.0
          %298 = vst [vmem:[#allocation2 + $0x150] sm:$0xff] 0.0
          %299 = vst [vmem:[#allocation2 + $0x158] sm:$0xff] 0.0
          %300 = vst [vmem:[#allocation2 + $0x160] sm:$0xff] 0.0
          %301 = vst [vmem:[#allocation2 + $0x168] sm:$0xff] 0.0
          %302 = vst [vmem:[#allocation2 + $0x170] sm:$0xff] 0.0
          %303 = vst [vmem:[#allocation2 + $0x178] sm:$0xff] 0.0
          %304 = vst [vmem:[#allocation2 + $0x180] sm:$0xff] 0.0
          %305 = vst [vmem:[#allocation2 + $0x188] sm:$0xff] 0.0
          %306 = vst [vmem:[#allocation2 + $0x190] sm:$0xff] 0.0
          %307 = vst [vmem:[#allocation2 + $0x198] sm:$0xff] 0.0
          %308 = vst [vmem:[#allocation2 + $0x1a0] sm:$0xff] 0.0
          %309 = vst [vmem:[#allocation2 + $0x1a8] sm:$0xff] 0.0
          %310 = vst [vmem:[#allocation2 + $0x1b0] sm:$0xff] 0.0
          %311 = vst [vmem:[#allocation2 + $0x1b8] sm:$0xff] 0.0
          %312 = vst [vmem:[#allocation2 + $0x1c0] sm:$0xff] 0.0
          %313 = vst [vmem:[#allocation2 + $0x1c8] sm:$0xff] 0.0
          %314 = vst [vmem:[#allocation2 + $0x1d0] sm:$0xff] 0.0
          %315 = vst [vmem:[#allocation2 + $0x1d8] sm:$0xff] 0.0
          %316 = vst [vmem:[#allocation2 + $0x1e0] sm:$0xff] 0.0
          %317 = vst [vmem:[#allocation2 + $0x1e8] sm:$0xff] 0.0
          %318 = vst [vmem:[#allocation2 + $0x1f0] sm:$0xff] 0.0
          %319 = vst [vmem:[#allocation2 + $0x1f8] sm:$0xff] 0.0
        $region36: #{conv2d_im2col.1} parent=31 // pred_fallthru
          _
        %v320 = vld [vmem:[#allocation2] sm:$0xff]
        %v321 = vld [vmem:[#allocation2 + $0x8] sm:$0xff]
        %v322 = vld [vmem:[#allocation2 + $0x10] sm:$0xff]
        %v323 = vld [vmem:[#allocation2 + $0x18] sm:$0xff]
        %v324 = vld [vmem:[#allocation2 + $0x20] sm:$0xff]
        %v325 = vld [vmem:[#allocation2 + $0x28] sm:$0xff]
        %v326 = vld [vmem:[#allocation2 + $0x30] sm:$0xff]
        %v327 = vld [vmem:[#allocation2 + $0x38] sm:$0xff]
        %v328 = vld [vmem:[#allocation2 + $0x40] sm:$0xff]
        %v329 = vld [vmem:[#allocation2 + $0x48] sm:$0xff]
        %v330 = vld [vmem:[#allocation2 + $0x50] sm:$0xff]
        %v331 = vld [vmem:[#allocation2 + $0x58] sm:$0xff]
        %v332 = vld [vmem:[#allocation2 + $0x60] sm:$0xff]
        %v333 = vld [vmem:[#allocation2 + $0x68] sm:$0xff]
        %v334 = vld [vmem:[#allocation2 + $0x70] sm:$0xff]
        %v335 = vld [vmem:[#allocation2 + $0x78] sm:$0xff]
        %v336 = vld [vmem:[#allocation2 + $0x80] sm:$0xff]
        %v337 = vld [vmem:[#allocation2 + $0x88] sm:$0xff]
        %v338 = vld [vmem:[#allocation2 + $0x90] sm:$0xff]
        %v339 = vld [vmem:[#allocation2 + $0x98] sm:$0xff]
        %v340 = vld [vmem:[#allocation2 + $0xa0] sm:$0xff]
        %v341 = vld [vmem:[#allocation2 + $0xa8] sm:$0xff]
        %v342 = vld [vmem:[#allocation2 + $0xb0] sm:$0xff]
        %v343 = vld [vmem:[#allocation2 + $0xb8] sm:$0xff]
        %v344 = vld [vmem:[#allocation2 + $0xc0] sm:$0xff]
        %v345 = vld [vmem:[#allocation2 + $0xc8] sm:$0xff]
        %v346 = vld [vmem:[#allocation2 + $0xd0] sm:$0xff]
        %v347 = vld [vmem:[#allocation2 + $0xd8] sm:$0xff]
        %v348 = vld [vmem:[#allocation2 + $0xe0] sm:$0xff]
        %v349 = vld [vmem:[#allocation2 + $0xe8] sm:$0xff]
        %v350 = vld [vmem:[#allocation2 + $0xf0] sm:$0xff]
        %v351 = vld [vmem:[#allocation2 + $0xf8] sm:$0xff]
        %v352 = vld [vmem:[#allocation2 + $0x100] sm:$0xff]
        %v353 = vld [vmem:[#allocation2 + $0x108] sm:$0xff]
        %v354 = vld [vmem:[#allocation2 + $0x110] sm:$0xff]
        %v355 = vld [vmem:[#allocation2 + $0x118] sm:$0xff]
        %v356 = vld [vmem:[#allocation2 + $0x120] sm:$0xff]
        %v357 = vld [vmem:[#allocation2 + $0x128] sm:$0xff]
        %v358 = vld [vmem:[#allocation2 + $0x130] sm:$0xff]
        %v359 = vld [vmem:[#allocation2 + $0x138] sm:$0xff]
        %v360 = vld [vmem:[#allocation2 + $0x140] sm:$0xff]
        %v361 = vld [vmem:[#allocation2 + $0x148] sm:$0xff]
        %v362 = vld [vmem:[#allocation2 + $0x150] sm:$0xff]
        %v363 = vld [vmem:[#allocation2 + $0x158] sm:$0xff]
        %v364 = vld [vmem:[#allocation2 + $0x160] sm:$0xff]
        %v365 = vld [vmem:[#allocation2 + $0x168] sm:$0xff]
        %v366 = vld [vmem:[#allocation2 + $0x170] sm:$0xff]
        %v367 = vld [vmem:[#allocation2 + $0x178] sm:$0xff]
        %v368 = vld [vmem:[#allocation2 + $0x180] sm:$0xff]
        %v369 = vld [vmem:[#allocation2 + $0x188] sm:$0xff]
        %v370 = vld [vmem:[#allocation2 + $0x190] sm:$0xff]
        %v371 = vld [vmem:[#allocation2 + $0x198] sm:$0xff]
        %v372 = vld [vmem:[#allocation2 + $0x1a0] sm:$0xff]
        %v373 = vld [vmem:[#allocation2 + $0x1a8] sm:$0xff]
        %v374 = vld [vmem:[#allocation2 + $0x1b0] sm:$0xff]
        %v375 = vld [vmem:[#allocation2 + $0x1b8] sm:$0xff]
        %v376 = vld [vmem:[#allocation2 + $0x1c0] sm:$0xff]
        %v377 = vld [vmem:[#allocation2 + $0x1c8] sm:$0xff]
        %v378 = vld [vmem:[#allocation2 + $0x1d0] sm:$0xff]
        %v379 = vld [vmem:[#allocation2 + $0x1d8] sm:$0xff]
        %v380 = vld [vmem:[#allocation2 + $0x1e0] sm:$0xff]
        %v381 = vld [vmem:[#allocation2 + $0x1e8] sm:$0xff]
        %v382 = vld [vmem:[#allocation2 + $0x1f0] sm:$0xff]
        %v383 = vld [vmem:[#allocation2 + $0x1f8] sm:$0xff]
        %v384 = vld [vmem:[%s236] sm:$0xf]
        %v385 = vld [vmem:[%s236 + $0x4] sm:$0xf]
        %v386 = vld [vmem:[%s236 + $0x8] sm:$0xf]
        %v387 = vld [vmem:[%s236 + $0xc] sm:$0xf]
        %v388 = vld [vmem:[%s236 + $0x10] sm:$0xf]
        %v389 = vld [vmem:[%s236 + $0x14] sm:$0xf]
        %v390 = vld [vmem:[%s236 + $0x18] sm:$0xf]
        %v391 = vld [vmem:[%s236 + $0x1c] sm:$0xf]
        %v392 = vld [vmem:[%s236 + $0x20] sm:$0xf]
        %v393 = vld [vmem:[%s236 + $0x24] sm:$0xf]
        %v394 = vld [vmem:[%s236 + $0x28] sm:$0xf]
        %v395 = vld [vmem:[%s236 + $0x2c] sm:$0xf]
        %v396 = vld [vmem:[%s236 + $0x30] sm:$0xf]
        %v397 = vld [vmem:[%s236 + $0x34] sm:$0xf]
        %v398 = vld [vmem:[%s236 + $0x38] sm:$0xf]
        %v399 = vld [vmem:[%s236 + $0x3c] sm:$0xf]
        %v400 = vld [vmem:[%s236 + $0x40] sm:$0xf]
        %v401 = vld [vmem:[%s236 + $0x44] sm:$0xf]
        %v402 = vld [vmem:[%s236 + $0x48] sm:$0xf]
        %v403 = vld [vmem:[%s236 + $0x4c] sm:$0xf]
        %v404 = vld [vmem:[%s236 + $0x50] sm:$0xf]
        %v405 = vld [vmem:[%s236 + $0x54] sm:$0xf]
        %v406 = vld [vmem:[%s236 + $0x58] sm:$0xf]
        %v407 = vld [vmem:[%s236 + $0x5c] sm:$0xf]
        %v408 = vld [vmem:[%s236 + $0x60] sm:$0xf]
        %v409 = vld [vmem:[%s236 + $0x64] sm:$0xf]
        %v410 = vld [vmem:[%s236 + $0x68] sm:$0xf]
        %v411 = vld [vmem:[%s236 + $0x6c] sm:$0xf]
        %v412 = vld [vmem:[%s236 + $0x70] sm:$0xf]
        %v413 = vld [vmem:[%s236 + $0x74] sm:$0xf]
        %v414 = vld [vmem:[%s236 + $0x78] sm:$0xf]
        %v415 = vld [vmem:[%s236 + $0x7c] sm:$0xf]
        %v416 = vld [vmem:[%s236 + $0x80] sm:$0xf]
        %v417 = vld [vmem:[%s236 + $0x84] sm:$0xf]
        %v418 = vld [vmem:[%s236 + $0x88] sm:$0xf]
        %v419 = vld [vmem:[%s236 + $0x8c] sm:$0xf]
        %v420 = vld [vmem:[%s236 + $0x90] sm:$0xf]
        %v421 = vld [vmem:[%s236 + $0x94] sm:$0xf]
        %v422 = vld [vmem:[%s236 + $0x98] sm:$0xf]
        %v423 = vld [vmem:[%s236 + $0x9c] sm:$0xf]
        %v424 = vld [vmem:[%s236 + $0xa0] sm:$0xf]
        %v425 = vld [vmem:[%s236 + $0xa4] sm:$0xf]
        %v426 = vld [vmem:[%s236 + $0xa8] sm:$0xf]
        %v427 = vld [vmem:[%s236 + $0xac] sm:$0xf]
        %v428 = vld [vmem:[%s236 + $0xb0] sm:$0xf]
        %v429 = vld [vmem:[%s236 + $0xb4] sm:$0xf]
        %v430 = vld [vmem:[%s236 + $0xb8] sm:$0xf]
        %v431 = vld [vmem:[%s236 + $0xbc] sm:$0xf]
        %v432 = vld [vmem:[%s236 + $0xc0] sm:$0xf]
        %v433 = vld [vmem:[%s236 + $0xc4] sm:$0xf]
        %v434 = vld [vmem:[%s236 + $0xc8] sm:$0xf]
        %v435 = vld [vmem:[%s236 + $0xcc] sm:$0xf]
        %v436 = vld [vmem:[%s236 + $0xd0] sm:$0xf]
        %v437 = vld [vmem:[%s236 + $0xd4] sm:$0xf]
        %v438 = vld [vmem:[%s236 + $0xd8] sm:$0xf]
        %v439 = vld [vmem:[%s236 + $0xdc] sm:$0xf]
        %v440 = vld [vmem:[%s236 + $0xe0] sm:$0xf]
        %v441 = vld [vmem:[%s236 + $0xe4] sm:$0xf]
        %v442 = vld [vmem:[%s236 + $0xe8] sm:$0xf]
        %v443 = vld [vmem:[%s236 + $0xec] sm:$0xf]
        %v444 = vld [vmem:[%s236 + $0xf0] sm:$0xf]
        %v445 = vld [vmem:[%s236 + $0xf4] sm:$0xf]
        %v446 = vld [vmem:[%s236 + $0xf8] sm:$0xf]
        %v447 = vld [vmem:[%s236 + $0xfc] sm:$0xf]
        %v448 = vld [vmem:[%s245] sm:$0xf]
        %v449 = vld [vmem:[%s245 + $0x4] sm:$0xf]
        %v450 = vld [vmem:[%s245 + $0x8] sm:$0xf]
        %v451 = vld [vmem:[%s245 + $0xc] sm:$0xf]
        %v516 = vunpack.c.l.b16 %v384
        %v517 = vunpack.c.l.b16 %v385
        %v518 = vunpack.c.l.b16 %v386
        %v519 = vunpack.c.l.b16 %v387
        %v520 = vunpack.c.l.b16 %v388
        %v521 = vunpack.c.l.b16 %v389
        %v522 = vunpack.c.l.b16 %v390
        %v523 = vunpack.c.l.b16 %v391
        %v524 = vunpack.c.l.b16 %v392
        %v525 = vunpack.c.l.b16 %v393
        %v526 = vunpack.c.l.b16 %v394
        %v527 = vunpack.c.l.b16 %v395
        %v528 = vunpack.c.l.b16 %v396
        %v529 = vunpack.c.l.b16 %v397
        %v530 = vunpack.c.l.b16 %v398
        %v531 = vunpack.c.l.b16 %v399
        %v532 = vunpack.c.l.b16 %v400
        %v533 = vunpack.c.l.b16 %v401
        %v534 = vunpack.c.l.b16 %v402
        %v535 = vunpack.c.l.b16 %v403
        %v536 = vunpack.c.l.b16 %v404
        %v537 = vunpack.c.l.b16 %v405
        %v538 = vunpack.c.l.b16 %v406
        %v539 = vunpack.c.l.b16 %v407
        %v540 = vunpack.c.l.b16 %v408
        %v541 = vunpack.c.l.b16 %v409
        %v542 = vunpack.c.l.b16 %v410
        %v543 = vunpack.c.l.b16 %v411
        %v544 = vunpack.c.l.b16 %v412
        %v545 = vunpack.c.l.b16 %v413
        %v546 = vunpack.c.l.b16 %v414
        %v547 = vunpack.c.l.b16 %v415
        %v548 = vunpack.c.l.b16 %v416
        %v549 = vunpack.c.l.b16 %v417
        %v550 = vunpack.c.l.b16 %v418
        %v551 = vunpack.c.l.b16 %v419
        %v552 = vunpack.c.l.b16 %v420
        %v553 = vunpack.c.l.b16 %v421
        %v554 = vunpack.c.l.b16 %v422
        %v555 = vunpack.c.l.b16 %v423
        %v556 = vunpack.c.l.b16 %v424
        %v557 = vunpack.c.l.b16 %v425
        %v558 = vunpack.c.l.b16 %v426
        %v559 = vunpack.c.l.b16 %v427
        %v560 = vunpack.c.l.b16 %v428
        %v561 = vunpack.c.l.b16 %v429
        %v562 = vunpack.c.l.b16 %v430
        %v563 = vunpack.c.l.b16 %v431
        %v564 = vunpack.c.l.b16 %v432
        %v565 = vunpack.c.l.b16 %v433
        %v566 = vunpack.c.l.b16 %v434
        %v567 = vunpack.c.l.b16 %v435
        %v568 = vunpack.c.l.b16 %v436
        %v569 = vunpack.c.l.b16 %v437
        %v570 = vunpack.c.l.b16 %v438
        %v571 = vunpack.c.l.b16 %v439
        %v572 = vunpack.c.l.b16 %v440
        %v573 = vunpack.c.l.b16 %v441
        %v574 = vunpack.c.l.b16 %v442
        %v575 = vunpack.c.l.b16 %v443
        %v576 = vunpack.c.l.b16 %v444
        %v577 = vunpack.c.l.b16 %v445
        %v578 = vunpack.c.l.b16 %v446
        %v579 = vunpack.c.l.b16 %v447
        %v580 = vpack.c.b16 %v517, %v516
        %v581 = vpack.c.b16 %v519, %v518
        %v582 = vpack.c.b16 %v521, %v520
        %v583 = vpack.c.b16 %v523, %v522
        %v584 = vpack.c.b16 %v525, %v524
        %v585 = vpack.c.b16 %v527, %v526
        %v586 = vpack.c.b16 %v529, %v528
        %v587 = vpack.c.b16 %v531, %v530
        %v588 = vpack.c.b16 %v533, %v532
        %v589 = vpack.c.b16 %v535, %v534
        %v590 = vpack.c.b16 %v537, %v536
        %v591 = vpack.c.b16 %v539, %v538
        %v592 = vpack.c.b16 %v541, %v540
        %v593 = vpack.c.b16 %v543, %v542
        %v594 = vpack.c.b16 %v545, %v544
        %v595 = vpack.c.b16 %v547, %v546
        %v596 = vpack.c.b16 %v549, %v548
        %v597 = vpack.c.b16 %v551, %v550
        %v598 = vpack.c.b16 %v553, %v552
        %v599 = vpack.c.b16 %v555, %v554
        %v600 = vpack.c.b16 %v557, %v556
        %v601 = vpack.c.b16 %v559, %v558
        %v602 = vpack.c.b16 %v561, %v560
        %v603 = vpack.c.b16 %v563, %v562
        %v604 = vpack.c.b16 %v565, %v564
        %v605 = vpack.c.b16 %v567, %v566
        %v606 = vpack.c.b16 %v569, %v568
        %v607 = vpack.c.b16 %v571, %v570
        %v608 = vpack.c.b16 %v573, %v572
        %v609 = vpack.c.b16 %v575, %v574
        %v610 = vpack.c.b16 %v577, %v576
        %v611 = vpack.c.b16 %v579, %v578
        %v616 = vunpack.c.l.b16 %v448
        %v617 = vunpack.c.l.b16 %v449
        %v618 = vunpack.c.l.b16 %v450
        %v619 = vunpack.c.l.b16 %v451
        %v620 = vpack.c.b16 %v617, %v616
        %v621 = vpack.c.b16 %v619, %v618
        %vm624 = vcmask 261120
        %v626 = vsel %vm624, %v580, 0
        %v629 = vsel %vm624, %v581, 0
        %v632 = vsel %vm624, %v582, 0
        %v635 = vsel %vm624, %v583, 0
        %v638 = vsel %vm624, %v584, 0
        %v641 = vsel %vm624, %v585, 0
        %v644 = vsel %vm624, %v586, 0
        %v647 = vsel %vm624, %v587, 0
        %v650 = vsel %vm624, %v588, 0
        %v653 = vsel %vm624, %v589, 0
        %v656 = vsel %vm624, %v590, 0
        %v659 = vsel %vm624, %v591, 0
        %v662 = vsel %vm624, %v592, 0
        %v665 = vsel %vm624, %v593, 0
        %v668 = vsel %vm624, %v594, 0
        %v671 = vsel %vm624, %v595, 0
        %v674 = vsel %vm624, %v596, 0
        %v677 = vsel %vm624, %v597, 0
        %v680 = vsel %vm624, %v598, 0
        %v683 = vsel %vm624, %v599, 0
        %v686 = vsel %vm624, %v600, 0
        %v689 = vsel %vm624, %v601, 0
        %v692 = vsel %vm624, %v602, 0
        %v695 = vsel %vm624, %v603, 0
        %v698 = vsel %vm624, %v604, 0
        %v701 = vsel %vm624, %v605, 0
        %v704 = vsel %vm624, %v606, 0
        %v707 = vsel %vm624, %v607, 0
        %v710 = vsel %vm624, %v608, 0
        %v713 = vsel %vm624, %v609, 0
        %v716 = vsel %vm624, %v610, 0
        %v719 = vsel %vm624, %v611, 0
        %721 = vmatprep.subr.bf16.mxu0 0
        %722 = vmatpush1.bf16.msra.mxu0 %v620
        %723 = vmatprep.subr.bf16.mxu0 0
        %724 = vmatpush1.bf16.msra.mxu0 %v621
        %725 = vmatprep.subr.bf16.mxu0 0
        %726 = vmatpush1.bf16.msra.mxu0 0
        %727 = vmatprep.subr.bf16.mxu0 0
        %728 = vmatpush1.bf16.msra.mxu0 0
        %729 = vmatprep.subr.bf16.mxu0 0
        %730 = vmatpush1.bf16.msra.mxu0 0
        %731 = vmatprep.subr.bf16.mxu0 0
        %732 = vmatpush1.bf16.msra.mxu0 0
        %733 = vmatprep.subr.bf16.mxu0 0
        %734 = vmatpush1.bf16.msra.mxu0 0
        %735 = vmatprep.subr.bf16.mxu0 0
        %736 = vmatpush1.bf16.msra.mxu0 0
        %737 = vmatprep.subr.bf16.mxu0 0
        %738 = vmatpush1.bf16.msra.mxu0 0
        %739 = vmatprep.subr.bf16.mxu0 0
        %740 = vmatpush1.bf16.msra.mxu0 0
        %741 = vmatprep.subr.bf16.mxu0 0
        %742 = vmatpush1.bf16.msra.mxu0 0
        %743 = vmatprep.subr.bf16.mxu0 0
        %744 = vmatpush1.bf16.msra.mxu0 0
        %745 = vmatprep.subr.bf16.mxu0 0
        %746 = vmatpush1.bf16.msra.mxu0 0
        %747 = vmatprep.subr.bf16.mxu0 0
        %748 = vmatpush1.bf16.msra.mxu0 0
        %749 = vmatprep.subr.bf16.mxu0 0
        %750 = vmatpush1.bf16.msra.mxu0 0
        %751 = vmatprep.subr.bf16.mxu0 0
        %752 = vmatpush1.bf16.msra.mxu0 0
        %753 = vmatprep.mubr.bf16.mxu0 0
        %754 = vmatmul.mubr.bf16.gmra.mrb[0].mxu0 %v626
        %v755 = vpop.f32.mrb[0].mxu0
        %v756 = vadd.f32 0.0, %v755
        %v757 = vpop.f32.mrb[0].mxu0
        %v758 = vpop.f32.mrb[0].mxu0
        %v759 = vadd.f32 0.0, %v758
        %v760 = vpop.f32.mrb[0].mxu0
        %761 = vmatprep.mubr.bf16.mxu0 0
        %762 = vmatmul.mubr.bf16.gmra.mrb[0].mxu0 %v629
        %v763 = vpop.f32.mrb[0].mxu0
        %v764 = vadd.f32 0.0, %v763
        %v765 = vpop.f32.mrb[0].mxu0
        %v766 = vpop.f32.mrb[0].mxu0
        %v767 = vadd.f32 0.0, %v766
        %v768 = vpop.f32.mrb[0].mxu0
        %769 = vmatprep.mubr.bf16.mxu0 0
        %770 = vmatmul.mubr.bf16.gmra.mrb[0].mxu0 %v632
        %v771 = vpop.f32.mrb[0].mxu0
        %v772 = vadd.f32 0.0, %v771
        %v773 = vpop.f32.mrb[0].mxu0
        %v774 = vpop.f32.mrb[0].mxu0
        %v775 = vadd.f32 0.0, %v774
        %v776 = vpop.f32.mrb[0].mxu0
        %777 = vmatprep.mubr.bf16.mxu0 0
        %778 = vmatmul.mubr.bf16.gmra.mrb[0].mxu0 %v635
        %v779 = vpop.f32.mrb[0].mxu0
        %v780 = vadd.f32 0.0, %v779
        %v781 = vpop.f32.mrb[0].mxu0
        %v782 = vpop.f32.mrb[0].mxu0
        %v783 = vadd.f32 0.0, %v782
        %v784 = vpop.f32.mrb[0].mxu0
        %785 = vmatprep.mubr.bf16.mxu0 0
        %786 = vmatmul.mubr.bf16.gmra.mrb[0].mxu0 %v638
        %v787 = vpop.f32.mrb[0].mxu0
        %v788 = vadd.f32 0.0, %v787
        %v789 = vpop.f32.mrb[0].mxu0
        %v790 = vpop.f32.mrb[0].mxu0
        %v791 = vadd.f32 0.0, %v790
        %v792 = vpop.f32.mrb[0].mxu0
        %793 = vmatprep.mubr.bf16.mxu0 0
        %794 = vmatmul.mubr.bf16.gmra.mrb[0].mxu0 %v641
        %v795 = vpop.f32.mrb[0].mxu0
        %v796 = vadd.f32 0.0, %v795
        %v797 = vpop.f32.mrb[0].mxu0
        %v798 = vpop.f32.mrb[0].mxu0
        %v799 = vadd.f32 0.0, %v798
        %v800 = vpop.f32.mrb[0].mxu0
        %801 = vmatprep.mubr.bf16.mxu0 0
        %802 = vmatmul.mubr.bf16.gmra.mrb[0].mxu0 %v644
        %v803 = vpop.f32.mrb[0].mxu0
        %v804 = vadd.f32 0.0, %v803
        %v805 = vpop.f32.mrb[0].mxu0
        %v806 = vpop.f32.mrb[0].mxu0
        %v807 = vadd.f32 0.0, %v806
        %v808 = vpop.f32.mrb[0].mxu0
        %809 = vmatprep.mubr.bf16.mxu0 0
        %810 = vmatmul.mubr.bf16.gmra.mrb[0].mxu0 %v647
        %v811 = vpop.f32.mrb[0].mxu0
        %v812 = vadd.f32 0.0, %v811
        %v813 = vpop.f32.mrb[0].mxu0
        %v814 = vpop.f32.mrb[0].mxu0
        %v815 = vadd.f32 0.0, %v814
        %v816 = vpop.f32.mrb[0].mxu0
        %817 = vmatprep.mubr.bf16.mxu0 0
        %818 = vmatmul.mubr.bf16.gmra.mrb[0].mxu0 %v650
        %v819 = vpop.f32.mrb[0].mxu0
        %v820 = vadd.f32 0.0, %v819
        %v821 = vpop.f32.mrb[0].mxu0
        %v822 = vpop.f32.mrb[0].mxu0
        %v823 = vadd.f32 0.0, %v822
        %v824 = vpop.f32.mrb[0].mxu0
        %825 = vmatprep.mubr.bf16.mxu0 0
        %826 = vmatmul.mubr.bf16.gmra.mrb[0].mxu0 %v653
        %v827 = vpop.f32.mrb[0].mxu0
        %v828 = vadd.f32 0.0, %v827
        %v829 = vpop.f32.mrb[0].mxu0
        %v830 = vpop.f32.mrb[0].mxu0
        %v831 = vadd.f32 0.0, %v830
        %v832 = vpop.f32.mrb[0].mxu0
        %833 = vmatprep.mubr.bf16.mxu0 0
        %834 = vmatmul.mubr.bf16.gmra.mrb[0].mxu0 %v656
        %v835 = vpop.f32.mrb[0].mxu0
        %v836 = vadd.f32 0.0, %v835
        %v837 = vpop.f32.mrb[0].mxu0
        %v838 = vpop.f32.mrb[0].mxu0
        %v839 = vadd.f32 0.0, %v838
        %v840 = vpop.f32.mrb[0].mxu0
        %841 = vmatprep.mubr.bf16.mxu0 0
        %842 = vmatmul.mubr.bf16.gmra.mrb[0].mxu0 %v659
        %v843 = vpop.f32.mrb[0].mxu0
        %v844 = vadd.f32 0.0, %v843
        %v845 = vpop.f32.mrb[0].mxu0
        %v846 = vpop.f32.mrb[0].mxu0
        %v847 = vadd.f32 0.0, %v846
        %v848 = vpop.f32.mrb[0].mxu0
        %849 = vmatprep.mubr.bf16.mxu0 0
        %850 = vmatmul.mubr.bf16.gmra.mrb[0].mxu0 %v662
        %v851 = vpop.f32.mrb[0].mxu0
        %v852 = vadd.f32 0.0, %v851
        %v853 = vpop.f32.mrb[0].mxu0
        %v854 = vpop.f32.mrb[0].mxu0
        %v855 = vadd.f32 0.0, %v854
        %v856 = vpop.f32.mrb[0].mxu0
        %857 = vmatprep.mubr.bf16.mxu0 0
        %858 = vmatmul.mubr.bf16.gmra.mrb[0].mxu0 %v665
        %v859 = vpop.f32.mrb[0].mxu0
        %v860 = vadd.f32 0.0, %v859
        %v861 = vpop.f32.mrb[0].mxu0
        %v862 = vpop.f32.mrb[0].mxu0
        %v863 = vadd.f32 0.0, %v862
        %v864 = vpop.f32.mrb[0].mxu0
        %865 = vmatprep.mubr.bf16.mxu0 0
        %866 = vmatmul.mubr.bf16.gmra.mrb[0].mxu0 %v668
        %v867 = vpop.f32.mrb[0].mxu0
        %v868 = vadd.f32 0.0, %v867
        %v869 = vpop.f32.mrb[0].mxu0
        %v870 = vpop.f32.mrb[0].mxu0
        %v871 = vadd.f32 0.0, %v870
        %v872 = vpop.f32.mrb[0].mxu0
        %873 = vmatprep.mubr.bf16.mxu0 0
        %874 = vmatmul.mubr.bf16.gmra.mrb[0].mxu0 %v671
        %v875 = vpop.f32.mrb[0].mxu0
        %v876 = vadd.f32 0.0, %v875
        %v877 = vpop.f32.mrb[0].mxu0
        %v878 = vpop.f32.mrb[0].mxu0
        %v879 = vadd.f32 0.0, %v878
        %v880 = vpop.f32.mrb[0].mxu0
        %881 = vmatprep.mubr.bf16.mxu0 0
        %882 = vmatmul.mubr.bf16.gmra.mrb[0].mxu0 %v674
        %v883 = vpop.f32.mrb[0].mxu0
        %v884 = vadd.f32 0.0, %v883
        %v885 = vpop.f32.mrb[0].mxu0
        %v886 = vpop.f32.mrb[0].mxu0
        %v887 = vadd.f32 0.0, %v886
        %v888 = vpop.f32.mrb[0].mxu0
        %889 = vmatprep.mubr.bf16.mxu0 0
        %890 = vmatmul.mubr.bf16.gmra.mrb[0].mxu0 %v677
        %v891 = vpop.f32.mrb[0].mxu0
        %v892 = vadd.f32 0.0, %v891
        %v893 = vpop.f32.mrb[0].mxu0
        %v894 = vpop.f32.mrb[0].mxu0
        %v895 = vadd.f32 0.0, %v894
        %v896 = vpop.f32.mrb[0].mxu0
        %897 = vmatprep.mubr.bf16.mxu0 0
        %898 = vmatmul.mubr.bf16.gmra.mrb[0].mxu0 %v680
        %v899 = vpop.f32.mrb[0].mxu0
        %v900 = vadd.f32 0.0, %v899
        %v901 = vpop.f32.mrb[0].mxu0
        %v902 = vpop.f32.mrb[0].mxu0
        %v903 = vadd.f32 0.0, %v902
        %v904 = vpop.f32.mrb[0].mxu0
        %905 = vmatprep.mubr.bf16.mxu0 0
        %906 = vmatmul.mubr.bf16.gmra.mrb[0].mxu0 %v683
        %v907 = vpop.f32.mrb[0].mxu0
        %v908 = vadd.f32 0.0, %v907
        %v909 = vpop.f32.mrb[0].mxu0
        %v910 = vpop.f32.mrb[0].mxu0
        %v911 = vadd.f32 0.0, %v910
        %v912 = vpop.f32.mrb[0].mxu0
        %913 = vmatprep.mubr.bf16.mxu0 0
        %914 = vmatmul.mubr.bf16.gmra.mrb[0].mxu0 %v686
        %v915 = vpop.f32.mrb[0].mxu0
        %v916 = vadd.f32 0.0, %v915
        %v917 = vpop.f32.mrb[0].mxu0
        %v918 = vpop.f32.mrb[0].mxu0
        %v919 = vadd.f32 0.0, %v918
        %v920 = vpop.f32.mrb[0].mxu0
        %921 = vmatprep.mubr.bf16.mxu0 0
        %922 = vmatmul.mubr.bf16.gmra.mrb[0].mxu0 %v689
        %v923 = vpop.f32.mrb[0].mxu0
        %v924 = vadd.f32 0.0, %v923
        %v925 = vpop.f32.mrb[0].mxu0
        %v926 = vpop.f32.mrb[0].mxu0
        %v927 = vadd.f32 0.0, %v926
        %v928 = vpop.f32.mrb[0].mxu0
        %929 = vmatprep.mubr.bf16.mxu0 0
        %930 = vmatmul.mubr.bf16.gmra.mrb[0].mxu0 %v692
        %v931 = vpop.f32.mrb[0].mxu0
        %v932 = vadd.f32 0.0, %v931
        %v933 = vpop.f32.mrb[0].mxu0
        %v934 = vpop.f32.mrb[0].mxu0
        %v935 = vadd.f32 0.0, %v934
        %v936 = vpop.f32.mrb[0].mxu0
        %937 = vmatprep.mubr.bf16.mxu0 0
        %938 = vmatmul.mubr.bf16.gmra.mrb[0].mxu0 %v695
        %v939 = vpop.f32.mrb[0].mxu0
        %v940 = vadd.f32 0.0, %v939
        %v941 = vpop.f32.mrb[0].mxu0
        %v942 = vpop.f32.mrb[0].mxu0
        %v943 = vadd.f32 0.0, %v942
        %v944 = vpop.f32.mrb[0].mxu0
        %945 = vmatprep.mubr.bf16.mxu0 0
        %946 = vmatmul.mubr.bf16.gmra.mrb[0].mxu0 %v698
        %v947 = vpop.f32.mrb[0].mxu0
        %v948 = vadd.f32 0.0, %v947
        %v949 = vpop.f32.mrb[0].mxu0
        %v950 = vpop.f32.mrb[0].mxu0
        %v951 = vadd.f32 0.0, %v950
        %v952 = vpop.f32.mrb[0].mxu0
        %953 = vmatprep.mubr.bf16.mxu0 0
        %954 = vmatmul.mubr.bf16.gmra.mrb[0].mxu0 %v701
        %v955 = vpop.f32.mrb[0].mxu0
        %v956 = vadd.f32 0.0, %v955
        %v957 = vpop.f32.mrb[0].mxu0
        %v958 = vpop.f32.mrb[0].mxu0
        %v959 = vadd.f32 0.0, %v958
        %v960 = vpop.f32.mrb[0].mxu0
        %961 = vmatprep.mubr.bf16.mxu0 0
        %962 = vmatmul.mubr.bf16.gmra.mrb[0].mxu0 %v704
        %v963 = vpop.f32.mrb[0].mxu0
        %v964 = vadd.f32 0.0, %v963
        %v965 = vpop.f32.mrb[0].mxu0
        %v966 = vpop.f32.mrb[0].mxu0
        %v967 = vadd.f32 0.0, %v966
        %v968 = vpop.f32.mrb[0].mxu0
        %969 = vmatprep.mubr.bf16.mxu0 0
        %970 = vmatmul.mubr.bf16.gmra.mrb[0].mxu0 %v707
        %v971 = vpop.f32.mrb[0].mxu0
        %v972 = vadd.f32 0.0, %v971
        %v973 = vpop.f32.mrb[0].mxu0
        %v974 = vpop.f32.mrb[0].mxu0
        %v975 = vadd.f32 0.0, %v974
        %v976 = vpop.f32.mrb[0].mxu0
        %977 = vmatprep.mubr.bf16.mxu0 0
        %978 = vmatmul.mubr.bf16.gmra.mrb[0].mxu0 %v710
        %v979 = vpop.f32.mrb[0].mxu0
        %v980 = vadd.f32 0.0, %v979
        %v981 = vpop.f32.mrb[0].mxu0
        %v982 = vpop.f32.mrb[0].mxu0
        %v983 = vadd.f32 0.0, %v982
        %v984 = vpop.f32.mrb[0].mxu0
        %985 = vmatprep.mubr.bf16.mxu0 0
        %986 = vmatmul.mubr.bf16.gmra.mrb[0].mxu0 %v713
        %v987 = vpop.f32.mrb[0].mxu0
        %v988 = vadd.f32 0.0, %v987
        %v989 = vpop.f32.mrb[0].mxu0
        %v990 = vpop.f32.mrb[0].mxu0
        %v991 = vadd.f32 0.0, %v990
        %v992 = vpop.f32.mrb[0].mxu0
        %993 = vmatprep.mubr.bf16.mxu0 0
        %994 = vmatmul.mubr.bf16.gmra.mrb[0].mxu0 %v716
        %v995 = vpop.f32.mrb[0].mxu0
        %v996 = vadd.f32 0.0, %v995
        %v997 = vpop.f32.mrb[0].mxu0
        %v998 = vpop.f32.mrb[0].mxu0
        %v999 = vadd.f32 0.0, %v998
        %v1000 = vpop.f32.mrb[0].mxu0
        %1001 = vmatprep.mubr.bf16.mxu0 0
        %1002 = vmatmul.mubr.bf16.gmra.mrb[0].mxu0 %v719
        %v1003 = vpop.f32.mrb[0].mxu0
        %v1004 = vadd.f32 0.0, %v1003
        %v1005 = vpop.f32.mrb[0].mxu0
        %v1006 = vpop.f32.mrb[0].mxu0
        %v1007 = vadd.f32 0.0, %v1006
        %v1008 = vpop.f32.mrb[0].mxu0
        %1009 = vdwg.mxu0
        %v1010 = vadd.f32 %v320, %v756
        %v1011 = vadd.f32 %v321, %v759
        %v1012 = vadd.f32 %v322, %v764
        %v1013 = vadd.f32 %v323, %v767
        %v1014 = vadd.f32 %v324, %v772
        %v1015 = vadd.f32 %v325, %v775
        %v1016 = vadd.f32 %v326, %v780
        %v1017 = vadd.f32 %v327, %v783
        %v1018 = vadd.f32 %v328, %v788
        %v1019 = vadd.f32 %v329, %v791
        %v1020 = vadd.f32 %v330, %v796
        %v1021 = vadd.f32 %v331, %v799
        %v1022 = vadd.f32 %v332, %v804
        %v1023 = vadd.f32 %v333, %v807
        %v1024 = vadd.f32 %v334, %v812
        %v1025 = vadd.f32 %v335, %v815
        %v1026 = vadd.f32 %v336, %v820
        %v1027 = vadd.f32 %v337, %v823
        %v1028 = vadd.f32 %v338, %v828
        %v1029 = vadd.f32 %v339, %v831
        %v1030 = vadd.f32 %v340, %v836
        %v1031 = vadd.f32 %v341, %v839
        %v1032 = vadd.f32 %v342, %v844
        %v1033 = vadd.f32 %v343, %v847
        %v1034 = vadd.f32 %v344, %v852
        %v1035 = vadd.f32 %v345, %v855
        %v1036 = vadd.f32 %v346, %v860
        %v1037 = vadd.f32 %v347, %v863
        %v1038 = vadd.f32 %v348, %v868
        %v1039 = vadd.f32 %v349, %v871
        %v1040 = vadd.f32 %v350, %v876
        %v1041 = vadd.f32 %v351, %v879
        %v1042 = vadd.f32 %v352, %v884
        %v1043 = vadd.f32 %v353, %v887
        %v1044 = vadd.f32 %v354, %v892
        %v1045 = vadd.f32 %v355, %v895
        %v1046 = vadd.f32 %v356, %v900
        %v1047 = vadd.f32 %v357, %v903
        %v1048 = vadd.f32 %v358, %v908
        %v1049 = vadd.f32 %v359, %v911
        %v1050 = vadd.f32 %v360, %v916
        %v1051 = vadd.f32 %v361, %v919
        %v1052 = vadd.f32 %v362, %v924
        %v1053 = vadd.f32 %v363, %v927
        %v1054 = vadd.f32 %v364, %v932
        %v1055 = vadd.f32 %v365, %v935
        %v1056 = vadd.f32 %v366, %v940
        %v1057 = vadd.f32 %v367, %v943
        %v1058 = vadd.f32 %v368, %v948
        %v1059 = vadd.f32 %v369, %v951
        %v1060 = vadd.f32 %v370, %v956
        %v1061 = vadd.f32 %v371, %v959
        %v1062 = vadd.f32 %v372, %v964
        %v1063 = vadd.f32 %v373, %v967
        %v1064 = vadd.f32 %v374, %v972
        %v1065 = vadd.f32 %v375, %v975
        %v1066 = vadd.f32 %v376, %v980
        %v1067 = vadd.f32 %v377, %v983
        %v1068 = vadd.f32 %v378, %v988
        %v1069 = vadd.f32 %v379, %v991
        %v1070 = vadd.f32 %v380, %v996
        %v1071 = vadd.f32 %v381, %v999
        %v1072 = vadd.f32 %v382, %v1004
        %v1073 = vadd.f32 %v383, %v1007
        %1074 = vst [vmem:[#allocation2] sm:$0xff] %v1010
        %1075 = vst [vmem:[#allocation2 + $0x8] sm:$0xff] %v1011
        %1076 = vst [vmem:[#allocation2 + $0x10] sm:$0xff] %v1012
        %1077 = vst [vmem:[#allocation2 + $0x18] sm:$0xff] %v1013
        %1078 = vst [vmem:[#allocation2 + $0x20] sm:$0xff] %v1014
        %1079 = vst [vmem:[#allocation2 + $0x28] sm:$0xff] %v1015
        %1080 = vst [vmem:[#allocation2 + $0x30] sm:$0xff] %v1016
        %1081 = vst [vmem:[#allocation2 + $0x38] sm:$0xff] %v1017
        %1082 = vst [vmem:[#allocation2 + $0x40] sm:$0xff] %v1018
        %1083 = vst [vmem:[#allocation2 + $0x48] sm:$0xff] %v1019
        %1084 = vst [vmem:[#allocation2 + $0x50] sm:$0xff] %v1020
        %1085 = vst [vmem:[#allocation2 + $0x58] sm:$0xff] %v1021
        %1086 = vst [vmem:[#allocation2 + $0x60] sm:$0xff] %v1022
        %1087 = vst [vmem:[#allocation2 + $0x68] sm:$0xff] %v1023
        %1088 = vst [vmem:[#allocation2 + $0x70] sm:$0xff] %v1024
        %1089 = vst [vmem:[#allocation2 + $0x78] sm:$0xff] %v1025
        %1090 = vst [vmem:[#allocation2 + $0x80] sm:$0xff] %v1026
        %1091 = vst [vmem:[#allocation2 + $0x88] sm:$0xff] %v1027
        %1092 = vst [vmem:[#allocation2 + $0x90] sm:$0xff] %v1028
        %1093 = vst [vmem:[#allocation2 + $0x98] sm:$0xff] %v1029
        %1094 = vst [vmem:[#allocation2 + $0xa0] sm:$0xff] %v1030
        %1095 = vst [vmem:[#allocation2 + $0xa8] sm:$0xff] %v1031
        %1096 = vst [vmem:[#allocation2 + $0xb0] sm:$0xff] %v1032
        %1097 = vst [vmem:[#allocation2 + $0xb8] sm:$0xff] %v1033
        %1098 = vst [vmem:[#allocation2 + $0xc0] sm:$0xff] %v1034
        %1099 = vst [vmem:[#allocation2 + $0xc8] sm:$0xff] %v1035
        %1100 = vst [vmem:[#allocation2 + $0xd0] sm:$0xff] %v1036
        %1101 = vst [vmem:[#allocation2 + $0xd8] sm:$0xff] %v1037
        %1102 = vst [vmem:[#allocation2 + $0xe0] sm:$0xff] %v1038
        %1103 = vst [vmem:[#allocation2 + $0xe8] sm:$0xff] %v1039
        %1104 = vst [vmem:[#allocation2 + $0xf0] sm:$0xff] %v1040
        %1105 = vst [vmem:[#allocation2 + $0xf8] sm:$0xff] %v1041
        %1106 = vst [vmem:[#allocation2 + $0x100] sm:$0xff] %v1042
        %1107 = vst [vmem:[#allocation2 + $0x108] sm:$0xff] %v1043
        %1108 = vst [vmem:[#allocation2 + $0x110] sm:$0xff] %v1044
        %1109 = vst [vmem:[#allocation2 + $0x118] sm:$0xff] %v1045
        %1110 = vst [vmem:[#allocation2 + $0x120] sm:$0xff] %v1046
        %1111 = vst [vmem:[#allocation2 + $0x128] sm:$0xff] %v1047
        %1112 = vst [vmem:[#allocation2 + $0x130] sm:$0xff] %v1048
        %1113 = vst [vmem:[#allocation2 + $0x138] sm:$0xff] %v1049
        %1114 = vst [vmem:[#allocation2 + $0x140] sm:$0xff] %v1050
        %1115 = vst [vmem:[#allocation2 + $0x148] sm:$0xff] %v1051
        %1116 = vst [vmem:[#allocation2 + $0x150] sm:$0xff] %v1052
        %1117 = vst [vmem:[#allocation2 + $0x158] sm:$0xff] %v1053
        %1118 = vst [vmem:[#allocation2 + $0x160] sm:$0xff] %v1054
        %1119 = vst [vmem:[#allocation2 + $0x168] sm:$0xff] %v1055
        %1120 = vst [vmem:[#allocation2 + $0x170] sm:$0xff] %v1056
        %1121 = vst [vmem:[#allocation2 + $0x178] sm:$0xff] %v1057
        %1122 = vst [vmem:[#allocation2 + $0x180] sm:$0xff] %v1058
        %1123 = vst [vmem:[#allocation2 + $0x188] sm:$0xff] %v1059
        %1124 = vst [vmem:[#allocation2 + $0x190] sm:$0xff] %v1060
        %1125 = vst [vmem:[#allocation2 + $0x198] sm:$0xff] %v1061
        %1126 = vst [vmem:[#allocation2 + $0x1a0] sm:$0xff] %v1062
        %1127 = vst [vmem:[#allocation2 + $0x1a8] sm:$0xff] %v1063
        %1128 = vst [vmem:[#allocation2 + $0x1b0] sm:$0xff] %v1064
        %1129 = vst [vmem:[#allocation2 + $0x1b8] sm:$0xff] %v1065
        %1130 = vst [vmem:[#allocation2 + $0x1c0] sm:$0xff] %v1066
        %1131 = vst [vmem:[#allocation2 + $0x1c8] sm:$0xff] %v1067
        %1132 = vst [vmem:[#allocation2 + $0x1d0] sm:$0xff] %v1068
        %1133 = vst [vmem:[#allocation2 + $0x1d8] sm:$0xff] %v1069
        %1134 = vst [vmem:[#allocation2 + $0x1e0] sm:$0xff] %v1070
        %1135 = vst [vmem:[#allocation2 + $0x1e8] sm:$0xff] %v1071
        %1136 = vst [vmem:[#allocation2 + $0x1f0] sm:$0xff] %v1072
        %1137 = vst [vmem:[#allocation2 + $0x1f8] sm:$0xff] %v1073
        // Predicated region
        $region37: #{conv2d_im2col.1} parent=31 // pred_check
          %p1138 = pneg %p252
        $region38: #{conv2d_im2col.1} parent=31 // pred_check_branch
          %1140 = sbr.rel (%p1138) target = $region40
        $region39: #{conv2d_im2col.1} parent=31 // pred_region
          %v1141 = vld [vmem:[#allocation2] sm:$0xff]
          %v1142 = vld [vmem:[#allocation2 + $0x8] sm:$0xff]
          %v1143 = vld [vmem:[#allocation2 + $0x10] sm:$0xff]
          %v1144 = vld [vmem:[#allocation2 + $0x18] sm:$0xff]
          %v1145 = vld [vmem:[#allocation2 + $0x20] sm:$0xff]
          %v1146 = vld [vmem:[#allocation2 + $0x28] sm:$0xff]
          %v1147 = vld [vmem:[#allocation2 + $0x30] sm:$0xff]
          %v1148 = vld [vmem:[#allocation2 + $0x38] sm:$0xff]
          %v1149 = vld [vmem:[#allocation2 + $0x40] sm:$0xff]
          %v1150 = vld [vmem:[#allocation2 + $0x48] sm:$0xff]
          %v1151 = vld [vmem:[#allocation2 + $0x50] sm:$0xff]
          %v1152 = vld [vmem:[#allocation2 + $0x58] sm:$0xff]
          %v1153 = vld [vmem:[#allocation2 + $0x60] sm:$0xff]
          %v1154 = vld [vmem:[#allocation2 + $0x68] sm:$0xff]
          %v1155 = vld [vmem:[#allocation2 + $0x70] sm:$0xff]
          %v1156 = vld [vmem:[#allocation2 + $0x78] sm:$0xff]
          %v1157 = vld [vmem:[#allocation2 + $0x80] sm:$0xff]
          %v1158 = vld [vmem:[#allocation2 + $0x88] sm:$0xff]
          %v1159 = vld [vmem:[#allocation2 + $0x90] sm:$0xff]
          %v1160 = vld [vmem:[#allocation2 + $0x98] sm:$0xff]
          %v1161 = vld [vmem:[#allocation2 + $0xa0] sm:$0xff]
          %v1162 = vld [vmem:[#allocation2 + $0xa8] sm:$0xff]
          %v1163 = vld [vmem:[#allocation2 + $0xb0] sm:$0xff]
          %v1164 = vld [vmem:[#allocation2 + $0xb8] sm:$0xff]
          %v1165 = vld [vmem:[#allocation2 + $0xc0] sm:$0xff]
          %v1166 = vld [vmem:[#allocation2 + $0xc8] sm:$0xff]
          %v1167 = vld [vmem:[#allocation2 + $0xd0] sm:$0xff]
          %v1168 = vld [vmem:[#allocation2 + $0xd8] sm:$0xff]
          %v1169 = vld [vmem:[#allocation2 + $0xe0] sm:$0xff]
          %v1170 = vld [vmem:[#allocation2 + $0xe8] sm:$0xff]
          %v1171 = vld [vmem:[#allocation2 + $0xf0] sm:$0xff]
          %v1172 = vld [vmem:[#allocation2 + $0xf8] sm:$0xff]
          %v1173 = vld [vmem:[#allocation2 + $0x100] sm:$0xff]
          %v1174 = vld [vmem:[#allocation2 + $0x108] sm:$0xff]
          %v1175 = vld [vmem:[#allocation2 + $0x110] sm:$0xff]
          %v1176 = vld [vmem:[#allocation2 + $0x118] sm:$0xff]
          %v1177 = vld [vmem:[#allocation2 + $0x120] sm:$0xff]
          %v1178 = vld [vmem:[#allocation2 + $0x128] sm:$0xff]
          %v1179 = vld [vmem:[#allocation2 + $0x130] sm:$0xff]
          %v1180 = vld [vmem:[#allocation2 + $0x138] sm:$0xff]
          %v1181 = vld [vmem:[#allocation2 + $0x140] sm:$0xff]
          %v1182 = vld [vmem:[#allocation2 + $0x148] sm:$0xff]
          %v1183 = vld [vmem:[#allocation2 + $0x150] sm:$0xff]
          %v1184 = vld [vmem:[#allocation2 + $0x158] sm:$0xff]
          %v1185 = vld [vmem:[#allocation2 + $0x160] sm:$0xff]
          %v1186 = vld [vmem:[#allocation2 + $0x168] sm:$0xff]
          %v1187 = vld [vmem:[#allocation2 + $0x170] sm:$0xff]
          %v1188 = vld [vmem:[#allocation2 + $0x178] sm:$0xff]
          %v1189 = vld [vmem:[#allocation2 + $0x180] sm:$0xff]
          %v1190 = vld [vmem:[#allocation2 + $0x188] sm:$0xff]
          %v1191 = vld [vmem:[#allocation2 + $0x190] sm:$0xff]
          %v1192 = vld [vmem:[#allocation2 + $0x198] sm:$0xff]
          %v1193 = vld [vmem:[#allocation2 + $0x1a0] sm:$0xff]
          %v1194 = vld [vmem:[#allocation2 + $0x1a8] sm:$0xff]
          %v1195 = vld [vmem:[#allocation2 + $0x1b0] sm:$0xff]
          %v1196 = vld [vmem:[#allocation2 + $0x1b8] sm:$0xff]
          %v1197 = vld [vmem:[#allocation2 + $0x1c0] sm:$0xff]
          %v1198 = vld [vmem:[#allocation2 + $0x1c8] sm:$0xff]
          %v1199 = vld [vmem:[#allocation2 + $0x1d0] sm:$0xff]
          %v1200 = vld [vmem:[#allocation2 + $0x1d8] sm:$0xff]
          %v1201 = vld [vmem:[#allocation2 + $0x1e0] sm:$0xff]
          %v1202 = vld [vmem:[#allocation2 + $0x1e8] sm:$0xff]
          %v1203 = vld [vmem:[#allocation2 + $0x1f0] sm:$0xff]
          %v1204 = vld [vmem:[#allocation2 + $0x1f8] sm:$0xff]
          %v1205 = vld [vmem:[%s249] sm:$0x1]
          %v1207 = vlaneseq
          %v1208 = vshrl.u32 %v1207, 7
          %v1209 = vsub.s32 0, %v1208
          %v1210 = vrot.slane %v1205, %v1209
          %v1212 = vadd.f32 %v1141, %v1210
          %v1213 = vadd.f32 %v1142, %v1210
          %v1214 = vadd.f32 %v1143, %v1210
          %v1215 = vadd.f32 %v1144, %v1210
          %v1216 = vadd.f32 %v1145, %v1210
          %v1217 = vadd.f32 %v1146, %v1210
          %v1218 = vadd.f32 %v1147, %v1210
          %v1219 = vadd.f32 %v1148, %v1210
          %v1220 = vadd.f32 %v1149, %v1210
          %v1221 = vadd.f32 %v1150, %v1210
          %v1222 = vadd.f32 %v1151, %v1210
          %v1223 = vadd.f32 %v1152, %v1210
          %v1224 = vadd.f32 %v1153, %v1210
          %v1225 = vadd.f32 %v1154, %v1210
          %v1226 = vadd.f32 %v1155, %v1210
          %v1227 = vadd.f32 %v1156, %v1210
          %v1228 = vadd.f32 %v1157, %v1210
          %v1229 = vadd.f32 %v1158, %v1210
          %v1230 = vadd.f32 %v1159, %v1210
          %v1231 = vadd.f32 %v1160, %v1210
          %v1232 = vadd.f32 %v1161, %v1210
          %v1233 = vadd.f32 %v1162, %v1210
          %v1234 = vadd.f32 %v1163, %v1210
          %v1235 = vadd.f32 %v1164, %v1210
          %v1236 = vadd.f32 %v1165, %v1210
          %v1237 = vadd.f32 %v1166, %v1210
          %v1238 = vadd.f32 %v1167, %v1210
          %v1239 = vadd.f32 %v1168, %v1210
          %v1240 = vadd.f32 %v1169, %v1210
          %v1241 = vadd.f32 %v1170, %v1210
          %v1242 = vadd.f32 %v1171, %v1210
          %v1243 = vadd.f32 %v1172, %v1210
          %v1244 = vadd.f32 %v1173, %v1210
          %v1245 = vadd.f32 %v1174, %v1210
          %v1246 = vadd.f32 %v1175, %v1210
          %v1247 = vadd.f32 %v1176, %v1210
          %v1248 = vadd.f32 %v1177, %v1210
          %v1249 = vadd.f32 %v1178, %v1210
          %v1250 = vadd.f32 %v1179, %v1210
          %v1251 = vadd.f32 %v1180, %v1210
          %v1252 = vadd.f32 %v1181, %v1210
          %v1253 = vadd.f32 %v1182, %v1210
          %v1254 = vadd.f32 %v1183, %v1210
          %v1255 = vadd.f32 %v1184, %v1210
          %v1256 = vadd.f32 %v1185, %v1210
          %v1257 = vadd.f32 %v1186, %v1210
          %v1258 = vadd.f32 %v1187, %v1210
          %v1259 = vadd.f32 %v1188, %v1210
          %v1260 = vadd.f32 %v1189, %v1210
          %v1261 = vadd.f32 %v1190, %v1210
          %v1262 = vadd.f32 %v1191, %v1210
          %v1263 = vadd.f32 %v1192, %v1210
          %v1264 = vadd.f32 %v1193, %v1210
          %v1265 = vadd.f32 %v1194, %v1210
          %v1266 = vadd.f32 %v1195, %v1210
          %v1267 = vadd.f32 %v1196, %v1210
          %v1268 = vadd.f32 %v1197, %v1210
          %v1269 = vadd.f32 %v1198, %v1210
          %v1270 = vadd.f32 %v1199, %v1210
          %v1271 = vadd.f32 %v1200, %v1210
          %v1272 = vadd.f32 %v1201, %v1210
          %v1273 = vadd.f32 %v1202, %v1210
          %v1274 = vadd.f32 %v1203, %v1210
          %v1275 = vadd.f32 %v1204, %v1210
          %v1276 = vmax.f32 %v1212, 0.0
          %v1277 = vmax.f32 %v1213, 0.0
          %v1278 = vmax.f32 %v1214, 0.0
          %v1279 = vmax.f32 %v1215, 0.0
          %v1280 = vmax.f32 %v1216, 0.0
          %v1281 = vmax.f32 %v1217, 0.0
          %v1282 = vmax.f32 %v1218, 0.0
          %v1283 = vmax.f32 %v1219, 0.0
          %v1284 = vmax.f32 %v1220, 0.0
          %v1285 = vmax.f32 %v1221, 0.0
          %v1286 = vmax.f32 %v1222, 0.0
          %v1287 = vmax.f32 %v1223, 0.0
          %v1288 = vmax.f32 %v1224, 0.0
          %v1289 = vmax.f32 %v1225, 0.0
          %v1290 = vmax.f32 %v1226, 0.0
          %v1291 = vmax.f32 %v1227, 0.0
          %v1292 = vmax.f32 %v1228, 0.0
          %v1293 = vmax.f32 %v1229, 0.0
          %v1294 = vmax.f32 %v1230, 0.0
          %v1295 = vmax.f32 %v1231, 0.0
          %v1296 = vmax.f32 %v1232, 0.0
          %v1297 = vmax.f32 %v1233, 0.0
          %v1298 = vmax.f32 %v1234, 0.0
          %v1299 = vmax.f32 %v1235, 0.0
          %v1300 = vmax.f32 %v1236, 0.0
          %v1301 = vmax.f32 %v1237, 0.0
          %v1302 = vmax.f32 %v1238, 0.0
          %v1303 = vmax.f32 %v1239, 0.0
          %v1304 = vmax.f32 %v1240, 0.0
          %v1305 = vmax.f32 %v1241, 0.0
          %v1306 = vmax.f32 %v1242, 0.0
          %v1307 = vmax.f32 %v1243, 0.0
          %v1308 = vmax.f32 %v1244, 0.0
          %v1309 = vmax.f32 %v1245, 0.0
          %v1310 = vmax.f32 %v1246, 0.0
          %v1311 = vmax.f32 %v1247, 0.0
          %v1312 = vmax.f32 %v1248, 0.0
          %v1313 = vmax.f32 %v1249, 0.0
          %v1314 = vmax.f32 %v1250, 0.0
          %v1315 = vmax.f32 %v1251, 0.0
          %v1316 = vmax.f32 %v1252, 0.0
          %v1317 = vmax.f32 %v1253, 0.0
          %v1318 = vmax.f32 %v1254, 0.0
          %v1319 = vmax.f32 %v1255, 0.0
          %v1320 = vmax.f32 %v1256, 0.0
          %v1321 = vmax.f32 %v1257, 0.0
          %v1322 = vmax.f32 %v1258, 0.0
          %v1323 = vmax.f32 %v1259, 0.0
          %v1324 = vmax.f32 %v1260, 0.0
          %v1325 = vmax.f32 %v1261, 0.0
          %v1326 = vmax.f32 %v1262, 0.0
          %v1327 = vmax.f32 %v1263, 0.0
          %v1328 = vmax.f32 %v1264, 0.0
          %v1329 = vmax.f32 %v1265, 0.0
          %v1330 = vmax.f32 %v1266, 0.0
          %v1331 = vmax.f32 %v1267, 0.0
          %v1332 = vmax.f32 %v1268, 0.0
          %v1333 = vmax.f32 %v1269, 0.0
          %v1334 = vmax.f32 %v1270, 0.0
          %v1335 = vmax.f32 %v1271, 0.0
          %v1336 = vmax.f32 %v1272, 0.0
          %v1337 = vmax.f32 %v1273, 0.0
          %v1338 = vmax.f32 %v1274, 0.0
          %v1339 = vmax.f32 %v1275, 0.0
          %v1340 = vpack.c.bf16 %v1277, %v1276
          %v1341 = vpack.c.bf16 %v1279, %v1278
          %v1342 = vpack.c.bf16 %v1281, %v1280
          %v1343 = vpack.c.bf16 %v1283, %v1282
          %v1344 = vpack.c.bf16 %v1285, %v1284
          %v1345 = vpack.c.bf16 %v1287, %v1286
          %v1346 = vpack.c.bf16 %v1289, %v1288
          %v1347 = vpack.c.bf16 %v1291, %v1290
          %v1348 = vpack.c.bf16 %v1293, %v1292
          %v1349 = vpack.c.bf16 %v1295, %v1294
          %v1350 = vpack.c.bf16 %v1297, %v1296
          %v1351 = vpack.c.bf16 %v1299, %v1298
          %v1352 = vpack.c.bf16 %v1301, %v1300
          %v1353 = vpack.c.bf16 %v1303, %v1302
          %v1354 = vpack.c.bf16 %v1305, %v1304
          %v1355 = vpack.c.bf16 %v1307, %v1306
          %v1356 = vpack.c.bf16 %v1309, %v1308
          %v1357 = vpack.c.bf16 %v1311, %v1310
          %v1358 = vpack.c.bf16 %v1313, %v1312
          %v1359 = vpack.c.bf16 %v1315, %v1314
          %v1360 = vpack.c.bf16 %v1317, %v1316
          %v1361 = vpack.c.bf16 %v1319, %v1318
          %v1362 = vpack.c.bf16 %v1321, %v1320
          %v1363 = vpack.c.bf16 %v1323, %v1322
          %v1364 = vpack.c.bf16 %v1325, %v1324
          %v1365 = vpack.c.bf16 %v1327, %v1326
          %v1366 = vpack.c.bf16 %v1329, %v1328
          %v1367 = vpack.c.bf16 %v1331, %v1330
          %v1368 = vpack.c.bf16 %v1333, %v1332
          %v1369 = vpack.c.bf16 %v1335, %v1334
          %v1370 = vpack.c.bf16 %v1337, %v1336
          %v1371 = vpack.c.bf16 %v1339, %v1338
          %v1404 = vunpack.c.l.b16 %v1340
          %v1405 = vunpack.c.h.b16 %v1340
          %v1406 = vunpack.c.l.b16 %v1341
          %v1407 = vunpack.c.h.b16 %v1341
          %v1408 = vunpack.c.l.b16 %v1342
          %v1409 = vunpack.c.h.b16 %v1342
          %v1410 = vunpack.c.l.b16 %v1343
          %v1411 = vunpack.c.h.b16 %v1343
          %v1412 = vunpack.c.l.b16 %v1344
          %v1413 = vunpack.c.h.b16 %v1344
          %v1414 = vunpack.c.l.b16 %v1345
          %v1415 = vunpack.c.h.b16 %v1345
          %v1416 = vunpack.c.l.b16 %v1346
          %v1417 = vunpack.c.h.b16 %v1346
          %v1418 = vunpack.c.l.b16 %v1347
          %v1419 = vunpack.c.h.b16 %v1347
          %v1420 = vunpack.c.l.b16 %v1348
          %v1421 = vunpack.c.h.b16 %v1348
          %v1422 = vunpack.c.l.b16 %v1349
          %v1423 = vunpack.c.h.b16 %v1349
          %v1424 = vunpack.c.l.b16 %v1350
          %v1425 = vunpack.c.h.b16 %v1350
          %v1426 = vunpack.c.l.b16 %v1351
          %v1427 = vunpack.c.h.b16 %v1351
          %v1428 = vunpack.c.l.b16 %v1352
          %v1429 = vunpack.c.h.b16 %v1352
          %v1430 = vunpack.c.l.b16 %v1353
          %v1431 = vunpack.c.h.b16 %v1353
          %v1432 = vunpack.c.l.b16 %v1354
          %v1433 = vunpack.c.h.b16 %v1354
          %v1434 = vunpack.c.l.b16 %v1355
          %v1435 = vunpack.c.h.b16 %v1355
          %v1436 = vunpack.c.l.b16 %v1356
          %v1437 = vunpack.c.h.b16 %v1356
          %v1438 = vunpack.c.l.b16 %v1357
          %v1439 = vunpack.c.h.b16 %v1357
          %v1440 = vunpack.c.l.b16 %v1358
          %v1441 = vunpack.c.h.b16 %v1358
          %v1442 = vunpack.c.l.b16 %v1359
          %v1443 = vunpack.c.h.b16 %v1359
          %v1444 = vunpack.c.l.b16 %v1360
          %v1445 = vunpack.c.h.b16 %v1360
          %v1446 = vunpack.c.l.b16 %v1361
          %v1447 = vunpack.c.h.b16 %v1361
          %v1448 = vunpack.c.l.b16 %v1362
          %v1449 = vunpack.c.h.b16 %v1362
          %v1450 = vunpack.c.l.b16 %v1363
          %v1451 = vunpack.c.h.b16 %v1363
          %v1452 = vunpack.c.l.b16 %v1364
          %v1453 = vunpack.c.h.b16 %v1364
          %v1454 = vunpack.c.l.b16 %v1365
          %v1455 = vunpack.c.h.b16 %v1365
          %v1456 = vunpack.c.l.b16 %v1366
          %v1457 = vunpack.c.h.b16 %v1366
          %v1458 = vunpack.c.l.b16 %v1367
          %v1459 = vunpack.c.h.b16 %v1367
          %v1460 = vunpack.c.l.b16 %v1368
          %v1461 = vunpack.c.h.b16 %v1368
          %v1462 = vunpack.c.l.b16 %v1369
          %v1463 = vunpack.c.h.b16 %v1369
          %v1464 = vunpack.c.l.b16 %v1370
          %v1465 = vunpack.c.h.b16 %v1370
          %v1466 = vunpack.c.l.b16 %v1371
          %v1467 = vunpack.c.h.b16 %v1371
          %v1468 = vpack.c.b16 %v1404, %v1404
          %v1469 = vpack.c.b16 %v1405, %v1405
          %v1470 = vpack.c.b16 %v1406, %v1406
          %v1471 = vpack.c.b16 %v1407, %v1407
          %v1472 = vpack.c.b16 %v1408, %v1408
          %v1473 = vpack.c.b16 %v1409, %v1409
          %v1474 = vpack.c.b16 %v1410, %v1410
          %v1475 = vpack.c.b16 %v1411, %v1411
          %v1476 = vpack.c.b16 %v1412, %v1412
          %v1477 = vpack.c.b16 %v1413, %v1413
          %v1478 = vpack.c.b16 %v1414, %v1414
          %v1479 = vpack.c.b16 %v1415, %v1415
          %v1480 = vpack.c.b16 %v1416, %v1416
          %v1481 = vpack.c.b16 %v1417, %v1417
          %v1482 = vpack.c.b16 %v1418, %v1418
          %v1483 = vpack.c.b16 %v1419, %v1419
          %v1484 = vpack.c.b16 %v1420, %v1420
          %v1485 = vpack.c.b16 %v1421, %v1421
          %v1486 = vpack.c.b16 %v1422, %v1422
          %v1487 = vpack.c.b16 %v1423, %v1423
          %v1488 = vpack.c.b16 %v1424, %v1424
          %v1489 = vpack.c.b16 %v1425, %v1425
          %v1490 = vpack.c.b16 %v1426, %v1426
          %v1491 = vpack.c.b16 %v1427, %v1427
          %v1492 = vpack.c.b16 %v1428, %v1428
          %v1493 = vpack.c.b16 %v1429, %v1429
          %v1494 = vpack.c.b16 %v1430, %v1430
          %v1495 = vpack.c.b16 %v1431, %v1431
          %v1496 = vpack.c.b16 %v1432, %v1432
          %v1497 = vpack.c.b16 %v1433, %v1433
          %v1498 = vpack.c.b16 %v1434, %v1434
          %v1499 = vpack.c.b16 %v1435, %v1435
          %v1500 = vpack.c.b16 %v1436, %v1436
          %v1501 = vpack.c.b16 %v1437, %v1437
          %v1502 = vpack.c.b16 %v1438, %v1438
          %v1503 = vpack.c.b16 %v1439, %v1439
          %v1504 = vpack.c.b16 %v1440, %v1440
          %v1505 = vpack.c.b16 %v1441, %v1441
          %v1506 = vpack.c.b16 %v1442, %v1442
          %v1507 = vpack.c.b16 %v1443, %v1443
          %v1508 = vpack.c.b16 %v1444, %v1444
          %v1509 = vpack.c.b16 %v1445, %v1445
          %v1510 = vpack.c.b16 %v1446, %v1446
          %v1511 = vpack.c.b16 %v1447, %v1447
          %v1512 = vpack.c.b16 %v1448, %v1448
          %v1513 = vpack.c.b16 %v1449, %v1449
          %v1514 = vpack.c.b16 %v1450, %v1450
          %v1515 = vpack.c.b16 %v1451, %v1451
          %v1516 = vpack.c.b16 %v1452, %v1452
          %v1517 = vpack.c.b16 %v1453, %v1453
          %v1518 = vpack.c.b16 %v1454, %v1454
          %v1519 = vpack.c.b16 %v1455, %v1455
          %v1520 = vpack.c.b16 %v1456, %v1456
          %v1521 = vpack.c.b16 %v1457, %v1457
          %v1522 = vpack.c.b16 %v1458, %v1458
          %v1523 = vpack.c.b16 %v1459, %v1459
          %v1524 = vpack.c.b16 %v1460, %v1460
          %v1525 = vpack.c.b16 %v1461, %v1461
          %v1526 = vpack.c.b16 %v1462, %v1462
          %v1527 = vpack.c.b16 %v1463, %v1463
          %v1528 = vpack.c.b16 %v1464, %v1464
          %v1529 = vpack.c.b16 %v1465, %v1465
          %v1530 = vpack.c.b16 %v1466, %v1466
          %v1531 = vpack.c.b16 %v1467, %v1467
          %1596 = vst [vmem:[%s228] sm:$0xf] %v1468
          %1597 = vst [vmem:[%s228 + $0x4] sm:$0xf] %v1469
          %1598 = vst [vmem:[%s228 + $0x8] sm:$0xf] %v1470
          %1599 = vst [vmem:[%s228 + $0xc] sm:$0xf] %v1471
          %1600 = vst [vmem:[%s228 + $0x10] sm:$0xf] %v1472
          %1601 = vst [vmem:[%s228 + $0x14] sm:$0xf] %v1473
          %1602 = vst [vmem:[%s228 + $0x18] sm:$0xf] %v1474
          %1603 = vst [vmem:[%s228 + $0x1c] sm:$0xf] %v1475
          %1604 = vst [vmem:[%s228 + $0x20] sm:$0xf] %v1476
          %1605 = vst [vmem:[%s228 + $0x24] sm:$0xf] %v1477
          %1606 = vst [vmem:[%s228 + $0x28] sm:$0xf] %v1478
          %1607 = vst [vmem:[%s228 + $0x2c] sm:$0xf] %v1479
          %1608 = vst [vmem:[%s228 + $0x30] sm:$0xf] %v1480
          %1609 = vst [vmem:[%s228 + $0x34] sm:$0xf] %v1481
          %1610 = vst [vmem:[%s228 + $0x38] sm:$0xf] %v1482
          %1611 = vst [vmem:[%s228 + $0x3c] sm:$0xf] %v1483
          %1612 = vst [vmem:[%s228 + $0x40] sm:$0xf] %v1484
          %1613 = vst [vmem:[%s228 + $0x44] sm:$0xf] %v1485
          %1614 = vst [vmem:[%s228 + $0x48] sm:$0xf] %v1486
          %1615 = vst [vmem:[%s228 + $0x4c] sm:$0xf] %v1487
          %1616 = vst [vmem:[%s228 + $0x50] sm:$0xf] %v1488
          %1617 = vst [vmem:[%s228 + $0x54] sm:$0xf] %v1489
          %1618 = vst [vmem:[%s228 + $0x58] sm:$0xf] %v1490
          %1619 = vst [vmem:[%s228 + $0x5c] sm:$0xf] %v1491
          %1620 = vst [vmem:[%s228 + $0x60] sm:$0xf] %v1492
          %1621 = vst [vmem:[%s228 + $0x64] sm:$0xf] %v1493
          %1622 = vst [vmem:[%s228 + $0x68] sm:$0xf] %v1494
          %1623 = vst [vmem:[%s228 + $0x6c] sm:$0xf] %v1495
          %1624 = vst [vmem:[%s228 + $0x70] sm:$0xf] %v1496
          %1625 = vst [vmem:[%s228 + $0x74] sm:$0xf] %v1497
          %1626 = vst [vmem:[%s228 + $0x78] sm:$0xf] %v1498
          %1627 = vst [vmem:[%s228 + $0x7c] sm:$0xf] %v1499
          %1628 = vst [vmem:[%s228 + $0x80] sm:$0xf] %v1500
          %1629 = vst [vmem:[%s228 + $0x84] sm:$0xf] %v1501
          %1630 = vst [vmem:[%s228 + $0x88] sm:$0xf] %v1502
          %1631 = vst [vmem:[%s228 + $0x8c] sm:$0xf] %v1503
          %1632 = vst [vmem:[%s228 + $0x90] sm:$0xf] %v1504
          %1633 = vst [vmem:[%s228 + $0x94] sm:$0xf] %v1505
          %1634 = vst [vmem:[%s228 + $0x98] sm:$0xf] %v1506
          %1635 = vst [vmem:[%s228 + $0x9c] sm:$0xf] %v1507
          %1636 = vst [vmem:[%s228 + $0xa0] sm:$0xf] %v1508
          %1637 = vst [vmem:[%s228 + $0xa4] sm:$0xf] %v1509
          %1638 = vst [vmem:[%s228 + $0xa8] sm:$0xf] %v1510
          %1639 = vst [vmem:[%s228 + $0xac] sm:$0xf] %v1511
          %1640 = vst [vmem:[%s228 + $0xb0] sm:$0xf] %v1512
          %1641 = vst [vmem:[%s228 + $0xb4] sm:$0xf] %v1513
          %1642 = vst [vmem:[%s228 + $0xb8] sm:$0xf] %v1514
          %1643 = vst [vmem:[%s228 + $0xbc] sm:$0xf] %v1515
          %1644 = vst [vmem:[%s228 + $0xc0] sm:$0xf] %v1516
          %1645 = vst [vmem:[%s228 + $0xc4] sm:$0xf] %v1517
          %1646 = vst [vmem:[%s228 + $0xc8] sm:$0xf] %v1518
          %1647 = vst [vmem:[%s228 + $0xcc] sm:$0xf] %v1519
          %1648 = vst [vmem:[%s228 + $0xd0] sm:$0xf] %v1520
          %1649 = vst [vmem:[%s228 + $0xd4] sm:$0xf] %v1521
          %1650 = vst [vmem:[%s228 + $0xd8] sm:$0xf] %v1522
          %1651 = vst [vmem:[%s228 + $0xdc] sm:$0xf] %v1523
          %1652 = vst [vmem:[%s228 + $0xe0] sm:$0xf] %v1524
          %1653 = vst [vmem:[%s228 + $0xe4] sm:$0xf] %v1525
          %1654 = vst [vmem:[%s228 + $0xe8] sm:$0xf] %v1526
          %1655 = vst [vmem:[%s228 + $0xec] sm:$0xf] %v1527
          %1656 = vst [vmem:[%s228 + $0xf0] sm:$0xf] %v1528
          %1657 = vst [vmem:[%s228 + $0xf4] sm:$0xf] %v1529
          %1658 = vst [vmem:[%s228 + $0xf8] sm:$0xf] %v1530
          %1659 = vst [vmem:[%s228 + $0xfc] sm:$0xf] %v1531
        $region40: #{conv2d_im2col.1} parent=31 // pred_fallthru
          _
        %s1660 = sand.u32 %s128, 1
        %s1661 = scalar_lea.sflag [#allocation4], %s1660
        %s1662 = sand.u32 %s128, 1
        %s1663 = smul.addr %s1662, 256
        %s1664 = scalar_lea.vmem [#allocation3], %s1663
        // Predicated region
        $region41: #{conv2d_im2col.1} parent=31 // pred_check
          %p1665 = pneg %p138
        $region42: #{conv2d_im2col.1} parent=31 // pred_check_branch
          %1667 = sbr.rel (%p1665) target = $region44
        $region43: #{conv2d_im2col.1} parent=31 // pred_region
          %s1668 = smul.u32 64, %s22
          %s1670 = ssub.s32 4096, 4096
          %1671 = vsyncadd %s1661, %s1670
          %s1672 = sadd.s32 %s23, %s1668
          %s1673 = smul.addr %s1672, 64
          %s1674 = scalar_lea.hbm %s3, %s1673
          %s1675 = sshll.u32 %s1664, 4
          %s1676 = int_to_ptr.vmem [resolvable:$true] %s1675
          %1681 = dma.vmem_to_hbm [thread:$0]  %s1676, 4096, %s1674, %s1661, 64, 64, 4
        $region44: #{conv2d_im2col.1} parent=31 // pred_fallthru
          _
      $region32: #{conv2d_im2col.1} parent=5 // pred_fallthru
        _
      %p1682 = scmp.le.s32.totalorder 2, %s12
      // Predicated region
      $region45: #{conv2d_im2col.1} parent=5 // pred_check
        %p1683 = pneg %p1682
      $region46: #{conv2d_im2col.1} parent=5 // pred_check_branch
        %1685 = sbr.rel (%p1683) target = $region48
      $region47: #{conv2d_im2col.1} parent=5 // pred_region
        %s1686 = ssub.s32 %s12, 2
        // Predicated region
        $region49: #{conv2d_im2col.1} parent=47 // pred_check
          %p1687 = pneg %p144
        $region50: #{conv2d_im2col.1} parent=47 // pred_check_branch
          %1689 = sbr.rel (%p1687) target = $region52
        $region51: #{conv2d_im2col.1} parent=47 // pred_region
          %s1690 = sand.u32 %s129, 1
          %s1691 = scalar_lea.sflag [#allocation4], %s1690
          %s1692 = sand.u32 %s129, 1
          %s1693 = smul.addr %s1692, 256
          %s1694 = scalar_lea.vmem [#allocation3], %s1693
          %1695 = dma.done %s1691, 4096
        $region52: #{conv2d_im2col.1} parent=47 // pred_fallthru
          _
      $region48: #{conv2d_im2col.1} parent=5 // pred_fallthru
        _
    $region6: #{conv2d_im2col.1} parent=1 // loop_footer
      %s16 = sadd.s32 1, %s12
    $region7: #{conv2d_im2col.1} parent=1 // loop_footer_branch
      %11 = sbr.rel target = $region3
    $region8: #{conv2d_im2col.1} parent=1 // loop_exit
      _
    %1696 = vsyncpa [#allocation4], 1
    %s1697 = scalar_lea.sflag [#allocation4], 1
    %1698 = vsyncpa %s1697, 1

</llo_original>
